<compile_context>
chip_gen: v6e
topology: v6e:2x2x1
jax: 0.10.0
libtpu: 0.0.40
codegen_flags: <defaults>
</compile_context>

<pallas_src>
import math
import numpy as np
import jax
import jax.numpy as jnp
from jax.experimental import pallas as pl
from jax.experimental.pallas import tpu as pltpu

# ----------------------------- configuration --------------------------------
FEATURE = 8
D_IN = 3
D_OUT = 1
HIDDEN = [32, 32, 32, 32]
SKIP_IN = (2,)
BIAS = 1.0
DIMS = [D_IN] + HIDDEN + [D_OUT + FEATURE]      # [3, 32, 32, 32, 32, 9]
NUM_LAYERS = len(DIMS)                          # 6 -> 5 linear layers
INV_SQRT2 = float(1.0 / np.sqrt(2.0))
SOFTPLUS_BETA = 100.0
SOFTPLUS_THRESH = 20.0                          # torch.nn.Softplus default threshold
OUT_DIM = D_OUT + FEATURE                       # 9
N_SKIP_H = DIMS[2] - D_IN                       # 29 (hidden part of the skip concat)


# ----------------------------- parameter init -------------------------------
def init_params(key):
    """Deterministic geometric init matching ImplicitNetwork.__init__ (multires=0).

    Weights are kept in PyTorch (out_dim, in_dim) layout (what the feature-major kernel
    wants), biases as (out_dim, 1). nn.utils.weight_norm at init is the identity
    (g is initialized to ||v||), so the effective forward weight equals the init weight.
    """
    params = []
    for l in range(NUM_LAYERS - 1):
        in_dim = DIMS[l]
        if l + 1 in SKIP_IN:
            out_dim = DIMS[l + 1] - DIMS[0]
        else:
            out_dim = DIMS[l + 1]
        key, wk = jax.random.split(key)
        if l == NUM_LAYERS - 2:
            mean = math.sqrt(math.pi) / math.sqrt(DIMS[l])
            w = mean + 1e-4 * jax.random.normal(wk, (out_dim, in_dim), jnp.float32)
            b = jnp.full((out_dim, 1), -BIAS, dtype=jnp.float32)
        else:
            std = math.sqrt(2.0) / math.sqrt(out_dim)
            w = std * jax.random.normal(wk, (out_dim, in_dim), jnp.float32)
            b = jnp.zeros((out_dim, 1), dtype=jnp.float32)
        params.append((w, b))
    return params


# ----------------------------- kernel ----------------------------------------
def _softplus100(x):
    # torch.nn.Softplus(beta=100): (1/beta)*log1p(exp(beta*x)), linear above threshold.
    bx = SOFTPLUS_BETA * x
    safe = jnp.minimum(bx, SOFTPLUS_THRESH)            # avoid overflow in exp
    return jnp.where(bx > SOFTPLUS_THRESH, x, jnp.log1p(jnp.exp(safe)) / SOFTPLUS_BETA)


def mlp_kernel(x_ref,
               w0_ref, b0_ref,
               w1_ref, b1_ref,
               w2a_ref, w2b_ref, b2_ref,
               w3_ref, b3_ref,
               w4_ref, b4_ref,
               out_ref):
    # Feature-major: x is (3, tm); every matmul is (out, in) @ (in, tm) -> (out, tm),
    # so the lane axis (tm) is dense for all loads, stores and the MXU-N dimension.
    x = x_ref[...]                                                           # (3, tm)

    h = _softplus100(jnp.dot(w0_ref[...], x,
                             preferred_element_type=jnp.float32) + b0_ref[...])   # (32, tm)
    h = _softplus100(jnp.dot(w1_ref[...], h,
                             preferred_element_type=jnp.float32) + b1_ref[...])   # (29, tm)

    # skip connection at l=2:  W2 @ (cat([h, x]) / sqrt(2))
    #   == W2a' @ h + W2b' @ x   with the 1/sqrt(2) already folded into W2a'/W2b'
    #   (split matmul, mathematically identical to the concatenation in PyTorch).
    h = _softplus100(
        jnp.dot(w2a_ref[...], h, preferred_element_type=jnp.float32)
        + jnp.dot(w2b_ref[...], x, preferred_element_type=jnp.float32)
        + b2_ref[...])                                                        # (32, tm)

    h = _softplus100(jnp.dot(w3_ref[...], h,
                             preferred_element_type=jnp.float32) + b3_ref[...])   # (32, tm)

    # final linear layer: no softplus; inside_out=False so no sign flip
    out_ref[...] = (jnp.dot(w4_ref[...], h,
                            preferred_element_type=jnp.float32) + b4_ref[...])    # (9, tm)


# ----------------------------- wrapper ---------------------------------------
def _choose_tile(n, tm_req):
    """Pick a lane-dense point tile and the padded point count."""
    tm_req = max(128, (int(tm_req) // 128) * 128)
    n128 = int(pl.cdiv(n, 128)) * 128            # n rounded up to a lane multiple
    tm = min(tm_req, n128)
    # Prefer at least 2 grid steps so both v7x TensorCores (megacore) get work.
    if n128 // tm < 2 and n128 >= 256:
        tm = max(128, ((n128 // 2) // 128) * 128)
    n_pad = int(pl.cdiv(n, tm)) * tm
    return tm, n_pad


def implicit_network_forward(x, params, *, tm=4096):
    """x: (N, d_in) f32 -> (N, d_out + feature_vector_size) f32."""
    N = x.shape[0]
    tm, n_pad = _choose_tile(N, tm)

    # Feature-major, lane-padded input (points on the lane axis).
    x_t = jnp.zeros((D_IN, n_pad), jnp.float32).at[:, :N].set(
        jnp.asarray(x, jnp.float32).T)

    (w0, b0), (w1, b1), (w2, b2), (w3, b3), (w4, b4) = params
    # Split the skip-layer weight into the part that multiplies the previous hidden
    # activation (first 29 input columns) and the part that multiplies the raw input
    # (last 3 columns), matching torch.cat([x, input], 1) ordering, and fold the
    # 1/sqrt(2) scaling into the (constant) weights once here.
    w2a = w2[:, :N_SKIP_H] * INV_SQRT2           # (32, 29)
    w2b = w2[:, N_SKIP_H:] * INV_SQRT2           # (32, 3)

    ins = [x_t, w0, b0, w1, b1, w2a, w2b, b2, w3, b3, w4, b4]

    def full_spec(a):
        nd = a.ndim
        return pl.BlockSpec(a.shape, lambda i, _nd=nd: (0,) * _nd)

    in_specs = [pl.BlockSpec((D_IN, tm), lambda i: (0, i))] + \
               [full_spec(a) for a in ins[1:]]

    out_t = pl.pallas_call(
        mlp_kernel,
        out_shape=jax.ShapeDtypeStruct((OUT_DIM, n_pad), jnp.float32),
        grid_spec=pltpu.PrefetchScalarGridSpec(
            num_scalar_prefetch=0,
            grid=(n_pad // tm,),
            in_specs=in_specs,
            out_specs=pl.BlockSpec((OUT_DIM, tm), lambda i: (0, i)),
        ),
        compiler_params=pltpu.CompilerParams(
            dimension_semantics=("parallel",),
            vmem_limit_bytes=32 * 1024 * 1024,
        ),
    )(*ins)                                       # (OUT_DIM, n_pad)

    return out_t[:, :N].T                         # back to points-major (N, OUT_DIM)


# ----------------------------- pure-JAX reference ----------------------------
def reference_forward(x, params):
    inp = x
    h = x
    for l in range(NUM_LAYERS - 1):
        w, b = params[l]                          # (out, in), (out, 1)
        if l in SKIP_IN:
            h = jnp.concatenate([h, inp], axis=1) / np.sqrt(2.0)
        h = h @ w.T + b[:, 0]
        if l < NUM_LAYERS - 2:
            bh = SOFTPLUS_BETA * h
            h = jnp.where(bh > SOFTPLUS_THRESH, h,
                          jnp.log1p(jnp.exp(jnp.minimum(bh, SOFTPLUS_THRESH))) / SOFTPLUS_BETA)
    return h


# ----------------------------- main -------------------------------------------
if __name__ == "__main__":
    key = jax.random.PRNGKey(0)
    pkey, xkey = jax.random.split(key)

    params = init_params(pkey)
    N = 1000                                      # non-multiple of 128: exercises padding
    x = jax.random.normal(xkey, (N, D_IN), dtype=jnp.float32)

    out = implicit_network_forward(x, params)     # tile auto-chosen (grid of 2 here)
    out = jax.block_until_ready(out)

    ref = jax.block_until_ready(reference_forward(x, params))
    assert out.shape == (N, OUT_DIM)
    if not bool(jnp.allclose(out, ref, rtol=5e-3, atol=5e-3)):
        raise AssertionError("Pallas kernel output does not match JAX reference")

    # TODO(synk): gradient()/get_outputs() use torch.autograd; analytic SDF gradients
    # are not re-implemented here (only the forward pass is kernelized).
    print("KERNEL_OK")
</pallas_src>

<mosaic_0001>
module attributes {stable_mosaic.version = 11 : i64} {
  func.func @mlp_kernel(%arg0: i32, %arg1: memref<3x512xf32, #tpu.memory_space<vmem>>, %arg2: memref<32x3xf32, #tpu.memory_space<vmem>>, %arg3: memref<32x1xf32, #tpu.memory_space<vmem>>, %arg4: memref<29x32xf32, #tpu.memory_space<vmem>>, %arg5: memref<29x1xf32, #tpu.memory_space<vmem>>, %arg6: memref<32x29xf32, #tpu.memory_space<vmem>>, %arg7: memref<32x3xf32, #tpu.memory_space<vmem>>, %arg8: memref<32x1xf32, #tpu.memory_space<vmem>>, %arg9: memref<32x32xf32, #tpu.memory_space<vmem>>, %arg10: memref<32x1xf32, #tpu.memory_space<vmem>>, %arg11: memref<9x32xf32, #tpu.memory_space<vmem>>, %arg12: memref<9x1xf32, #tpu.memory_space<vmem>>, %arg13: memref<9x512xf32, #tpu.memory_space<vmem>>) attributes {dimension_semantics = [#tpu.dimension_semantics<parallel>], iteration_bounds = array<i64: 2>, scalar_prefetch = 0 : i64, scratch_operands = 0 : i64, tpu.core_type = #tpu.core_type<tc>, window_params = [{transform_indices = @transform_0, window_bounds = array<i64: 3, 512>}, {pipeline_mode = #tpu.pipeline_mode<synchronous>, transform_indices = @transform_1, window_bounds = array<i64: 32, 3>}, {pipeline_mode = #tpu.pipeline_mode<synchronous>, transform_indices = @transform_2, window_bounds = array<i64: 32, 1>}, {pipeline_mode = #tpu.pipeline_mode<synchronous>, transform_indices = @transform_3, window_bounds = array<i64: 29, 32>}, {pipeline_mode = #tpu.pipeline_mode<synchronous>, transform_indices = @transform_4, window_bounds = array<i64: 29, 1>}, {pipeline_mode = #tpu.pipeline_mode<synchronous>, transform_indices = @transform_5, window_bounds = array<i64: 32, 29>}, {pipeline_mode = #tpu.pipeline_mode<synchronous>, transform_indices = @transform_6, window_bounds = array<i64: 32, 3>}, {pipeline_mode = #tpu.pipeline_mode<synchronous>, transform_indices = @transform_7, window_bounds = array<i64: 32, 1>}, {pipeline_mode = #tpu.pipeline_mode<synchronous>, transform_indices = @transform_8, window_bounds = array<i64: 32, 32>}, {pipeline_mode = #tpu.pipeline_mode<synchronous>, transform_indices = @transform_9, window_bounds = array<i64: 32, 1>}, {pipeline_mode = #tpu.pipeline_mode<synchronous>, transform_indices = @transform_10, window_bounds = array<i64: 9, 32>}, {pipeline_mode = #tpu.pipeline_mode<synchronous>, transform_indices = @transform_11, window_bounds = array<i64: 9, 1>}, {transform_indices = @transform_12, window_bounds = array<i64: 9, 512>}]} {
    %c0 = arith.constant 0 : index
    %c0_0 = arith.constant 0 : index
    %0 = vector.load %arg1[%c0, %c0_0] : memref<3x512xf32, #tpu.memory_space<vmem>>, vector<3x512xf32>
    %c0_1 = arith.constant 0 : index
    %c0_2 = arith.constant 0 : index
    %1 = vector.load %arg2[%c0_1, %c0_2] : memref<32x3xf32, #tpu.memory_space<vmem>>, vector<32x3xf32>
    %cst = arith.constant dense<0.000000e+00> : vector<32x512xf32>
    %2 = tpu.matmul %1, %0, %cst {dimension_numbers = #tpu.dot_dimension_numbers<[1], [0], [0], [1], [0, 0, 1, 1], [], []>} : vector<32x3xf32>, vector<3x512xf32>, vector<32x512xf32> -> vector<32x512xf32>
    %c0_3 = arith.constant 0 : index
    %c0_4 = arith.constant 0 : index
    %3 = vector.load %arg3[%c0_3, %c0_4] : memref<32x1xf32, #tpu.memory_space<vmem>>, vector<32x1xf32>
    %4 = vector.broadcast %3 : vector<32x1xf32> to vector<32x512xf32>
    %5 = arith.addf %2, %4 : vector<32x512xf32>
    %cst_5 = arith.constant 1.000000e+02 : f32
    %6 = vector.broadcast %cst_5 : f32 to vector<32x512xf32>
    %7 = arith.mulf %6, %5 : vector<32x512xf32>
    %cst_6 = arith.constant 2.000000e+01 : f32
    %8 = vector.broadcast %cst_6 : f32 to vector<32x512xf32>
    %9 = arith.minimumf %7, %8 : vector<32x512xf32>
    %cst_7 = arith.constant 2.000000e+01 : f32
    %10 = vector.broadcast %cst_7 : f32 to vector<32x512xf32>
    %11 = arith.cmpf ogt, %7, %10 : vector<32x512xf32>
    %12 = math.exp %9 : vector<32x512xf32>
    %13 = math.log1p %12 : vector<32x512xf32>
    %cst_8 = arith.constant 1.000000e+02 : f32
    %14 = vector.broadcast %cst_8 : f32 to vector<32x512xf32>
    %15 = arith.divf %13, %14 : vector<32x512xf32>
    %16 = arith.select %11, %5, %15 : vector<32x512xi1>, vector<32x512xf32>
    %c0_9 = arith.constant 0 : index
    %c0_10 = arith.constant 0 : index
    %17 = vector.load %arg4[%c0_9, %c0_10] : memref<29x32xf32, #tpu.memory_space<vmem>>, vector<29x32xf32>
    %cst_11 = arith.constant dense<0.000000e+00> : vector<29x512xf32>
    %18 = tpu.matmul %17, %16, %cst_11 {dimension_numbers = #tpu.dot_dimension_numbers<[1], [0], [0], [1], [0, 0, 1, 1], [], []>} : vector<29x32xf32>, vector<32x512xf32>, vector<29x512xf32> -> vector<29x512xf32>
    %c0_12 = arith.constant 0 : index
    %c0_13 = arith.constant 0 : index
    %19 = vector.load %arg5[%c0_12, %c0_13] : memref<29x1xf32, #tpu.memory_space<vmem>>, vector<29x1xf32>
    %20 = vector.broadcast %19 : vector<29x1xf32> to vector<29x512xf32>
    %21 = arith.addf %18, %20 : vector<29x512xf32>
    %cst_14 = arith.constant 1.000000e+02 : f32
    %22 = vector.broadcast %cst_14 : f32 to vector<29x512xf32>
    %23 = arith.mulf %22, %21 : vector<29x512xf32>
    %cst_15 = arith.constant 2.000000e+01 : f32
    %24 = vector.broadcast %cst_15 : f32 to vector<29x512xf32>
    %25 = arith.minimumf %23, %24 : vector<29x512xf32>
    %cst_16 = arith.constant 2.000000e+01 : f32
    %26 = vector.broadcast %cst_16 : f32 to vector<29x512xf32>
    %27 = arith.cmpf ogt, %23, %26 : vector<29x512xf32>
    %28 = math.exp %25 : vector<29x512xf32>
    %29 = math.log1p %28 : vector<29x512xf32>
    %cst_17 = arith.constant 1.000000e+02 : f32
    %30 = vector.broadcast %cst_17 : f32 to vector<29x512xf32>
    %31 = arith.divf %29, %30 : vector<29x512xf32>
    %32 = arith.select %27, %21, %31 : vector<29x512xi1>, vector<29x512xf32>
    %c0_18 = arith.constant 0 : index
    %c0_19 = arith.constant 0 : index
    %33 = vector.load %arg6[%c0_18, %c0_19] : memref<32x29xf32, #tpu.memory_space<vmem>>, vector<32x29xf32>
    %cst_20 = arith.constant dense<0.000000e+00> : vector<32x512xf32>
    %34 = tpu.matmul %33, %32, %cst_20 {dimension_numbers = #tpu.dot_dimension_numbers<[1], [0], [0], [1], [0, 0, 1, 1], [], []>} : vector<32x29xf32>, vector<29x512xf32>, vector<32x512xf32> -> vector<32x512xf32>
    %c0_21 = arith.constant 0 : index
    %c0_22 = arith.constant 0 : index
    %35 = vector.load %arg7[%c0_21, %c0_22] : memref<32x3xf32, #tpu.memory_space<vmem>>, vector<32x3xf32>
    %cst_23 = arith.constant dense<0.000000e+00> : vector<32x512xf32>
    %36 = tpu.matmul %35, %0, %cst_23 {dimension_numbers = #tpu.dot_dimension_numbers<[1], [0], [0], [1], [0, 0, 1, 1], [], []>} : vector<32x3xf32>, vector<3x512xf32>, vector<32x512xf32> -> vector<32x512xf32>
    %37 = arith.addf %34, %36 : vector<32x512xf32>
    %c0_24 = arith.constant 0 : index
    %c0_25 = arith.constant 0 : index
    %38 = vector.load %arg8[%c0_24, %c0_25] : memref<32x1xf32, #tpu.memory_space<vmem>>, vector<32x1xf32>
    %39 = vector.broadcast %38 : vector<32x1xf32> to vector<32x512xf32>
    %40 = arith.addf %37, %39 : vector<32x512xf32>
    %cst_26 = arith.constant 1.000000e+02 : f32
    %41 = vector.broadcast %cst_26 : f32 to vector<32x512xf32>
    %42 = arith.mulf %41, %40 : vector<32x512xf32>
    %cst_27 = arith.constant 2.000000e+01 : f32
    %43 = vector.broadcast %cst_27 : f32 to vector<32x512xf32>
    %44 = arith.minimumf %42, %43 : vector<32x512xf32>
    %cst_28 = arith.constant 2.000000e+01 : f32
    %45 = vector.broadcast %cst_28 : f32 to vector<32x512xf32>
    %46 = arith.cmpf ogt, %42, %45 : vector<32x512xf32>
    %47 = math.exp %44 : vector<32x512xf32>
    %48 = math.log1p %47 : vector<32x512xf32>
    %cst_29 = arith.constant 1.000000e+02 : f32
    %49 = vector.broadcast %cst_29 : f32 to vector<32x512xf32>
    %50 = arith.divf %48, %49 : vector<32x512xf32>
    %51 = arith.select %46, %40, %50 : vector<32x512xi1>, vector<32x512xf32>
    %c0_30 = arith.constant 0 : index
    %c0_31 = arith.constant 0 : index
    %52 = vector.load %arg9[%c0_30, %c0_31] : memref<32x32xf32, #tpu.memory_space<vmem>>, vector<32x32xf32>
    %cst_32 = arith.constant dense<0.000000e+00> : vector<32x512xf32>
    %53 = tpu.matmul %52, %51, %cst_32 {dimension_numbers = #tpu.dot_dimension_numbers<[1], [0], [0], [1], [0, 0, 1, 1], [], []>} : vector<32x32xf32>, vector<32x512xf32>, vector<32x512xf32> -> vector<32x512xf32>
    %c0_33 = arith.constant 0 : index
    %c0_34 = arith.constant 0 : index
    %54 = vector.load %arg10[%c0_33, %c0_34] : memref<32x1xf32, #tpu.memory_space<vmem>>, vector<32x1xf32>
    %55 = vector.broadcast %54 : vector<32x1xf32> to vector<32x512xf32>
    %56 = arith.addf %53, %55 : vector<32x512xf32>
    %cst_35 = arith.constant 1.000000e+02 : f32
    %57 = vector.broadcast %cst_35 : f32 to vector<32x512xf32>
    %58 = arith.mulf %57, %56 : vector<32x512xf32>
    %cst_36 = arith.constant 2.000000e+01 : f32
    %59 = vector.broadcast %cst_36 : f32 to vector<32x512xf32>
    %60 = arith.minimumf %58, %59 : vector<32x512xf32>
    %cst_37 = arith.constant 2.000000e+01 : f32
    %61 = vector.broadcast %cst_37 : f32 to vector<32x512xf32>
    %62 = arith.cmpf ogt, %58, %61 : vector<32x512xf32>
    %63 = math.exp %60 : vector<32x512xf32>
    %64 = math.log1p %63 : vector<32x512xf32>
    %cst_38 = arith.constant 1.000000e+02 : f32
    %65 = vector.broadcast %cst_38 : f32 to vector<32x512xf32>
    %66 = arith.divf %64, %65 : vector<32x512xf32>
    %67 = arith.select %62, %56, %66 : vector<32x512xi1>, vector<32x512xf32>
    %c0_39 = arith.constant 0 : index
    %c0_40 = arith.constant 0 : index
    %68 = vector.load %arg11[%c0_39, %c0_40] : memref<9x32xf32, #tpu.memory_space<vmem>>, vector<9x32xf32>
    %cst_41 = arith.constant dense<0.000000e+00> : vector<9x512xf32>
    %69 = tpu.matmul %68, %67, %cst_41 {dimension_numbers = #tpu.dot_dimension_numbers<[1], [0], [0], [1], [0, 0, 1, 1], [], []>} : vector<9x32xf32>, vector<32x512xf32>, vector<9x512xf32> -> vector<9x512xf32>
    %c0_42 = arith.constant 0 : index
    %c0_43 = arith.constant 0 : index
    %70 = vector.load %arg12[%c0_42, %c0_43] : memref<9x1xf32, #tpu.memory_space<vmem>>, vector<9x1xf32>
    %71 = vector.broadcast %70 : vector<9x1xf32> to vector<9x512xf32>
    %72 = arith.addf %69, %71 : vector<9x512xf32>
    %c0_44 = arith.constant 0 : index
    %c0_45 = arith.constant 0 : index
    %73 = vector.load %arg13[%c0_44, %c0_45] : memref<9x512xf32, #tpu.memory_space<vmem>>, vector<9x512xf32>
    tpu.vector_store %arg13[%c0_44, %c0_45], %72 {strides = array<i32>} : memref<9x512xf32, #tpu.memory_space<vmem>>, vector<9x512xf32>,
    return
  }
  func.func @transform_0(%arg0: i32) -> (i32, i32) {
    %c0_i32 = arith.constant 0 : i32
    %c0_i32_0 = arith.constant 0 : i32
    return %c0_i32, %arg0 : i32, i32
  }
  func.func @transform_1(%arg0: i32) -> (i32, i32) {
    %c0_i32 = arith.constant 0 : i32
    %c0_i32_0 = arith.constant 0 : i32
    %c0_i32_1 = arith.constant 0 : i32
    return %c0_i32, %c0_i32_0 : i32, i32
  }
  func.func @transform_2(%arg0: i32) -> (i32, i32) {
    %c0_i32 = arith.constant 0 : i32
    %c0_i32_0 = arith.constant 0 : i32
    %c0_i32_1 = arith.constant 0 : i32
    return %c0_i32, %c0_i32_0 : i32, i32
  }
  func.func @transform_3(%arg0: i32) -> (i32, i32) {
    %c0_i32 = arith.constant 0 : i32
    %c0_i32_0 = arith.constant 0 : i32
    %c0_i32_1 = arith.constant 0 : i32
    return %c0_i32, %c0_i32_0 : i32, i32
  }
  func.func @transform_4(%arg0: i32) -> (i32, i32) {
    %c0_i32 = arith.constant 0 : i32
    %c0_i32_0 = arith.constant 0 : i32
    %c0_i32_1 = arith.constant 0 : i32
    return %c0_i32, %c0_i32_0 : i32, i32
  }
  func.func @transform_5(%arg0: i32) -> (i32, i32) {
    %c0_i32 = arith.constant 0 : i32
    %c0_i32_0 = arith.constant 0 : i32
    %c0_i32_1 = arith.constant 0 : i32
    return %c0_i32, %c0_i32_0 : i32, i32
  }
  func.func @transform_6(%arg0: i32) -> (i32, i32) {
    %c0_i32 = arith.constant 0 : i32
    %c0_i32_0 = arith.constant 0 : i32
    %c0_i32_1 = arith.constant 0 : i32
    return %c0_i32, %c0_i32_0 : i32, i32
  }
  func.func @transform_7(%arg0: i32) -> (i32, i32) {
    %c0_i32 = arith.constant 0 : i32
    %c0_i32_0 = arith.constant 0 : i32
    %c0_i32_1 = arith.constant 0 : i32
    return %c0_i32, %c0_i32_0 : i32, i32
  }
  func.func @transform_8(%arg0: i32) -> (i32, i32) {
    %c0_i32 = arith.constant 0 : i32
    %c0_i32_0 = arith.constant 0 : i32
    %c0_i32_1 = arith.constant 0 : i32
    return %c0_i32, %c0_i32_0 : i32, i32
  }
  func.func @transform_9(%arg0: i32) -> (i32, i32) {
    %c0_i32 = arith.constant 0 : i32
    %c0_i32_0 = arith.constant 0 : i32
    %c0_i32_1 = arith.constant 0 : i32
    return %c0_i32, %c0_i32_0 : i32, i32
  }
  func.func @transform_10(%arg0: i32) -> (i32, i32) {
    %c0_i32 = arith.constant 0 : i32
    %c0_i32_0 = arith.constant 0 : i32
    %c0_i32_1 = arith.constant 0 : i32
    return %c0_i32, %c0_i32_0 : i32, i32
  }
  func.func @transform_11(%arg0: i32) -> (i32, i32) {
    %c0_i32 = arith.constant 0 : i32
    %c0_i32_0 = arith.constant 0 : i32
    %c0_i32_1 = arith.constant 0 : i32
    return %c0_i32, %c0_i32_0 : i32, i32
  }
  func.func @transform_12(%arg0: i32) -> (i32, i32) {
    %c0_i32 = arith.constant 0 : i32
    %c0_i32_0 = arith.constant 0 : i32
    return %c0_i32, %arg0 : i32, i32
  }
}

</mosaic_0001>

<llo_original>
// kernel: tpu_custom_call.1
$region0: #{tpu_custom_call.1}
  #allocation0 [shape = 'u32[]', space=smem, size = 0x4, offset = 0x4, fixed_abs, tag = 'smem constant byte address 0x4 - core index']
  #allocation1 [shape = 'u32[144,128]{1,0:T(1,128)}', space=vmem, size = 0x12000, scoped, tag = 'internal scratch']
  %s0 = inlined_call_operand.vmem [shape: f32[3,1024], index: 0, kind: input, shape index: {}]
  %s1 = inlined_call_operand.vmem [shape: f32[32,3], index: 1, kind: input, shape index: {}]
  %s2 = inlined_call_operand.vmem [shape: f32[32,1], index: 2, kind: input, shape index: {}]
  %s3 = inlined_call_operand.vmem [shape: f32[29,32], index: 3, kind: input, shape index: {}]
  %s4 = inlined_call_operand.vmem [shape: f32[29,1], index: 4, kind: input, shape index: {}]
  %s5 = inlined_call_operand.vmem [shape: f32[32,29], index: 5, kind: input, shape index: {}]
  %s6 = inlined_call_operand.vmem [shape: f32[32,3], index: 6, kind: input, shape index: {}]
  %s7 = inlined_call_operand.vmem [shape: f32[32,1], index: 7, kind: input, shape index: {}]
  %s8 = inlined_call_operand.vmem [shape: f32[32,32], index: 8, kind: input, shape index: {}]
  %s9 = inlined_call_operand.vmem [shape: f32[32,1], index: 9, kind: input, shape index: {}]
  %s10 = inlined_call_operand.vmem [shape: f32[9,32], index: 10, kind: input, shape index: {}]
  %s11 = inlined_call_operand.vmem [shape: f32[9,1], index: 11, kind: input, shape index: {}]
  %s12 = inlined_call_operand.hbm [shape: f32[9,1024], index: 12, kind: output, shape index: {}]
  %s13 = sld [smem:[#allocation0]]
  $region81: #{tpu_custom_call.1} parent=0
    _
  %s15 = ssub.s32 1, %s13
  %s16 = scalar_select 0, %s15, %s13
  $region1: #{tpu_custom_call.1} parent=0
    #allocation2 [shape = 'u8[65536]{0}', space=vmem, size = 0x10000, scoped, tag = 'output window, operand 0']
    #allocation3 [shape = 's32[2]{0}', space=sflag, size = 0x8, scoped, tag = 'scoped memory for tpu_custom_call.1']
    %17 = vsyncpa [#allocation3], 0
    %s18 = scalar_lea.sflag [#allocation3], 1
    %19 = vsyncpa %s18, 0
    loop: start=0, step=1, limit=4
    $region2: #{tpu_custom_call.1} parent=1 // loop_pre_header
      _
    $region3: #{tpu_custom_call.1} parent=1 // loop_header
      %s21 = sphi 0, %s25
      %p22 = scmp.ge.s32.totalorder %s21, 4
      %s31 = sphi 0, %s33
      %s34 = sphi 0, %s31
      %s35 = sphi 0, %s34
      %s51 = sphi 0, %s35
      %s55 = sphi 0, %s55
      %s57 = sphi 0, %s55
      %s58 = sphi 0, %s57
      %s72 = sphi 0, %s58
      %s76 = sphi 0, %s76
      %s78 = sphi 0, %s76
      %s79 = sphi 0, %s78
      %s93 = sphi 0, %s79
      %s97 = sphi 0, %s97
      %s99 = sphi 0, %s97
      %s100 = sphi 0, %s99
      %s114 = sphi 0, %s100
      %s118 = sphi 0, %s118
      %s120 = sphi 0, %s118
      %s121 = sphi 0, %s120
      %s135 = sphi 0, %s121
      %s139 = sphi 0, %s139
      %s141 = sphi 0, %s139
      %s142 = sphi 0, %s141
      %s156 = sphi 0, %s142
      %s160 = sphi 0, %s160
      %s162 = sphi 0, %s160
      %s163 = sphi 0, %s162
      %s177 = sphi 0, %s163
      %s181 = sphi 0, %s181
      %s183 = sphi 0, %s181
      %s184 = sphi 0, %s183
      %s198 = sphi 0, %s184
      %s202 = sphi 0, %s202
      %s204 = sphi 0, %s202
      %s205 = sphi 0, %s204
      %s219 = sphi 0, %s205
      %s223 = sphi 0, %s223
      %s225 = sphi 0, %s223
      %s226 = sphi 0, %s225
      %s240 = sphi 0, %s226
      %s244 = sphi 0, %s244
      %s246 = sphi 0, %s244
      %s247 = sphi 0, %s246
      %s261 = sphi 0, %s247
      %s265 = sphi 0, %s265
      %s267 = sphi 0, %s265
      %s268 = sphi 0, %s267
      %s282 = sphi 0, %s268
      %s288 = sphi 0, %s290
      %s291 = sphi 0, %s288
      %s292 = sphi 0, %s291
      %s308 = sphi 0, %s292
    $region4: #{tpu_custom_call.1} parent=1 // loop_header_branch
      %24 = sbr.rel (%p22) target = $region8
    $region5: #{tpu_custom_call.1} parent=1 // loop_body
      %s26 = ssub.s32 %s21, 1
      %s27 = ssub.s32 %s21, 2
      %s28 = sadd.s32 %s21, 1
      %s29 = ssub.s32 %s21, %s28
      %p30 = scmp.eq.s32.totalorder %s29, 0
      %s32 = sadd.s32 %s31, 1
      %s33 = scalar_select %p30, %s31, %s32
      %p36 = pneg %p30
      %p37 = scmp.eq.s32.totalorder %s21, 1
      %p38 = por %p36, %p37
      %p39 = scmp.ne.s32.totalorder %s31, %s34
      %p40 = scmp.eq.s32.totalorder %s21, 0
      %p41 = por %p39, %p40
      %p42 = scmp.ne.s32.totalorder %s31, %s34
      %p43 = scmp.eq.s32.totalorder %s26, 1
      %p44 = por %p42, %p43
      %p45 = scmp.ne.s32.totalorder %s34, %s35
      %p46 = scmp.eq.s32.totalorder %s26, 0
      %p47 = por %p45, %p46
      %p48 = scmp.ne.s32.totalorder %s34, %s35
      %p49 = scmp.eq.s32.totalorder %s27, 1
      %p50 = por %p48, %p49
      %p52 = scmp.ne.s32.totalorder %s35, %s51
      %p53 = scmp.eq.s32.totalorder %s27, 0
      %p54 = por %p52, %p53
      %s56 = sadd.s32 %s55, 1
      %p59 = scmp.eq.s32.totalorder %s21, 1
      %p60 = scmp.ne.s32.totalorder %s55, %s57
      %p61 = scmp.eq.s32.totalorder %s21, 0
      %p62 = por %p60, %p61
      %p63 = scmp.ne.s32.totalorder %s55, %s57
      %p64 = scmp.eq.s32.totalorder %s26, 1
      %p65 = por %p63, %p64
      %p66 = scmp.ne.s32.totalorder %s57, %s58
      %p67 = scmp.eq.s32.totalorder %s26, 0
      %p68 = por %p66, %p67
      %p69 = scmp.ne.s32.totalorder %s57, %s58
      %p70 = scmp.eq.s32.totalorder %s27, 1
      %p71 = por %p69, %p70
      %p73 = scmp.ne.s32.totalorder %s58, %s72
      %p74 = scmp.eq.s32.totalorder %s27, 0
      %p75 = por %p73, %p74
      %s77 = sadd.s32 %s76, 1
      %p80 = scmp.eq.s32.totalorder %s21, 1
      %p81 = scmp.ne.s32.totalorder %s76, %s78
      %p82 = scmp.eq.s32.totalorder %s21, 0
      %p83 = por %p81, %p82
      %p84 = scmp.ne.s32.totalorder %s76, %s78
      %p85 = scmp.eq.s32.totalorder %s26, 1
      %p86 = por %p84, %p85
      %p87 = scmp.ne.s32.totalorder %s78, %s79
      %p88 = scmp.eq.s32.totalorder %s26, 0
      %p89 = por %p87, %p88
      %p90 = scmp.ne.s32.totalorder %s78, %s79
      %p91 = scmp.eq.s32.totalorder %s27, 1
      %p92 = por %p90, %p91
      %p94 = scmp.ne.s32.totalorder %s79, %s93
      %p95 = scmp.eq.s32.totalorder %s27, 0
      %p96 = por %p94, %p95
      %s98 = sadd.s32 %s97, 1
      %p101 = scmp.eq.s32.totalorder %s21, 1
      %p102 = scmp.ne.s32.totalorder %s97, %s99
      %p103 = scmp.eq.s32.totalorder %s21, 0
      %p104 = por %p102, %p103
      %p105 = scmp.ne.s32.totalorder %s97, %s99
      %p106 = scmp.eq.s32.totalorder %s26, 1
      %p107 = por %p105, %p106
      %p108 = scmp.ne.s32.totalorder %s99, %s100
      %p109 = scmp.eq.s32.totalorder %s26, 0
      %p110 = por %p108, %p109
      %p111 = scmp.ne.s32.totalorder %s99, %s100
      %p112 = scmp.eq.s32.totalorder %s27, 1
      %p113 = por %p111, %p112
      %p115 = scmp.ne.s32.totalorder %s100, %s114
      %p116 = scmp.eq.s32.totalorder %s27, 0
      %p117 = por %p115, %p116
      %s119 = sadd.s32 %s118, 1
      %p122 = scmp.eq.s32.totalorder %s21, 1
      %p123 = scmp.ne.s32.totalorder %s118, %s120
      %p124 = scmp.eq.s32.totalorder %s21, 0
      %p125 = por %p123, %p124
      %p126 = scmp.ne.s32.totalorder %s118, %s120
      %p127 = scmp.eq.s32.totalorder %s26, 1
      %p128 = por %p126, %p127
      %p129 = scmp.ne.s32.totalorder %s120, %s121
      %p130 = scmp.eq.s32.totalorder %s26, 0
      %p131 = por %p129, %p130
      %p132 = scmp.ne.s32.totalorder %s120, %s121
      %p133 = scmp.eq.s32.totalorder %s27, 1
      %p134 = por %p132, %p133
      %p136 = scmp.ne.s32.totalorder %s121, %s135
      %p137 = scmp.eq.s32.totalorder %s27, 0
      %p138 = por %p136, %p137
      %s140 = sadd.s32 %s139, 1
      %p143 = scmp.eq.s32.totalorder %s21, 1
      %p144 = scmp.ne.s32.totalorder %s139, %s141
      %p145 = scmp.eq.s32.totalorder %s21, 0
      %p146 = por %p144, %p145
      %p147 = scmp.ne.s32.totalorder %s139, %s141
      %p148 = scmp.eq.s32.totalorder %s26, 1
      %p149 = por %p147, %p148
      %p150 = scmp.ne.s32.totalorder %s141, %s142
      %p151 = scmp.eq.s32.totalorder %s26, 0
      %p152 = por %p150, %p151
      %p153 = scmp.ne.s32.totalorder %s141, %s142
      %p154 = scmp.eq.s32.totalorder %s27, 1
      %p155 = por %p153, %p154
      %p157 = scmp.ne.s32.totalorder %s142, %s156
      %p158 = scmp.eq.s32.totalorder %s27, 0
      %p159 = por %p157, %p158
      %s161 = sadd.s32 %s160, 1
      %p164 = scmp.eq.s32.totalorder %s21, 1
      %p165 = scmp.ne.s32.totalorder %s160, %s162
      %p166 = scmp.eq.s32.totalorder %s21, 0
      %p167 = por %p165, %p166
      %p168 = scmp.ne.s32.totalorder %s160, %s162
      %p169 = scmp.eq.s32.totalorder %s26, 1
      %p170 = por %p168, %p169
      %p171 = scmp.ne.s32.totalorder %s162, %s163
      %p172 = scmp.eq.s32.totalorder %s26, 0
      %p173 = por %p171, %p172
      %p174 = scmp.ne.s32.totalorder %s162, %s163
      %p175 = scmp.eq.s32.totalorder %s27, 1
      %p176 = por %p174, %p175
      %p178 = scmp.ne.s32.totalorder %s163, %s177
      %p179 = scmp.eq.s32.totalorder %s27, 0
      %p180 = por %p178, %p179
      %s182 = sadd.s32 %s181, 1
      %p185 = scmp.eq.s32.totalorder %s21, 1
      %p186 = scmp.ne.s32.totalorder %s181, %s183
      %p187 = scmp.eq.s32.totalorder %s21, 0
      %p188 = por %p186, %p187
      %p189 = scmp.ne.s32.totalorder %s181, %s183
      %p190 = scmp.eq.s32.totalorder %s26, 1
      %p191 = por %p189, %p190
      %p192 = scmp.ne.s32.totalorder %s183, %s184
      %p193 = scmp.eq.s32.totalorder %s26, 0
      %p194 = por %p192, %p193
      %p195 = scmp.ne.s32.totalorder %s183, %s184
      %p196 = scmp.eq.s32.totalorder %s27, 1
      %p197 = por %p195, %p196
      %p199 = scmp.ne.s32.totalorder %s184, %s198
      %p200 = scmp.eq.s32.totalorder %s27, 0
      %p201 = por %p199, %p200
      %s203 = sadd.s32 %s202, 1
      %p206 = scmp.eq.s32.totalorder %s21, 1
      %p207 = scmp.ne.s32.totalorder %s202, %s204
      %p208 = scmp.eq.s32.totalorder %s21, 0
      %p209 = por %p207, %p208
      %p210 = scmp.ne.s32.totalorder %s202, %s204
      %p211 = scmp.eq.s32.totalorder %s26, 1
      %p212 = por %p210, %p211
      %p213 = scmp.ne.s32.totalorder %s204, %s205
      %p214 = scmp.eq.s32.totalorder %s26, 0
      %p215 = por %p213, %p214
      %p216 = scmp.ne.s32.totalorder %s204, %s205
      %p217 = scmp.eq.s32.totalorder %s27, 1
      %p218 = por %p216, %p217
      %p220 = scmp.ne.s32.totalorder %s205, %s219
      %p221 = scmp.eq.s32.totalorder %s27, 0
      %p222 = por %p220, %p221
      %s224 = sadd.s32 %s223, 1
      %p227 = scmp.eq.s32.totalorder %s21, 1
      %p228 = scmp.ne.s32.totalorder %s223, %s225
      %p229 = scmp.eq.s32.totalorder %s21, 0
      %p230 = por %p228, %p229
      %p231 = scmp.ne.s32.totalorder %s223, %s225
      %p232 = scmp.eq.s32.totalorder %s26, 1
      %p233 = por %p231, %p232
      %p234 = scmp.ne.s32.totalorder %s225, %s226
      %p235 = scmp.eq.s32.totalorder %s26, 0
      %p236 = por %p234, %p235
      %p237 = scmp.ne.s32.totalorder %s225, %s226
      %p238 = scmp.eq.s32.totalorder %s27, 1
      %p239 = por %p237, %p238
      %p241 = scmp.ne.s32.totalorder %s226, %s240
      %p242 = scmp.eq.s32.totalorder %s27, 0
      %p243 = por %p241, %p242
      %s245 = sadd.s32 %s244, 1
      %p248 = scmp.eq.s32.totalorder %s21, 1
      %p249 = scmp.ne.s32.totalorder %s244, %s246
      %p250 = scmp.eq.s32.totalorder %s21, 0
      %p251 = por %p249, %p250
      %p252 = scmp.ne.s32.totalorder %s244, %s246
      %p253 = scmp.eq.s32.totalorder %s26, 1
      %p254 = por %p252, %p253
      %p255 = scmp.ne.s32.totalorder %s246, %s247
      %p256 = scmp.eq.s32.totalorder %s26, 0
      %p257 = por %p255, %p256
      %p258 = scmp.ne.s32.totalorder %s246, %s247
      %p259 = scmp.eq.s32.totalorder %s27, 1
      %p260 = por %p258, %p259
      %p262 = scmp.ne.s32.totalorder %s247, %s261
      %p263 = scmp.eq.s32.totalorder %s27, 0
      %p264 = por %p262, %p263
      %s266 = sadd.s32 %s265, 1
      %p269 = scmp.eq.s32.totalorder %s21, 1
      %p270 = scmp.ne.s32.totalorder %s265, %s267
      %p271 = scmp.eq.s32.totalorder %s21, 0
      %p272 = por %p270, %p271
      %p273 = scmp.ne.s32.totalorder %s265, %s267
      %p274 = scmp.eq.s32.totalorder %s26, 1
      %p275 = por %p273, %p274
      %p276 = scmp.ne.s32.totalorder %s267, %s268
      %p277 = scmp.eq.s32.totalorder %s26, 0
      %p278 = por %p276, %p277
      %p279 = scmp.ne.s32.totalorder %s267, %s268
      %p280 = scmp.eq.s32.totalorder %s27, 1
      %p281 = por %p279, %p280
      %p283 = scmp.ne.s32.totalorder %s268, %s282
      %p284 = scmp.eq.s32.totalorder %s27, 0
      %p285 = por %p283, %p284
      %s286 = ssub.s32 %s21, %s28
      %p287 = scmp.eq.s32.totalorder %s286, 0
      %s289 = sadd.s32 %s288, 1
      %s290 = scalar_select %p287, %s288, %s289
      %p293 = pneg %p287
      %p294 = scmp.eq.s32.totalorder %s21, 1
      %p295 = por %p293, %p294
      %p296 = scmp.ne.s32.totalorder %s288, %s291
      %p297 = scmp.eq.s32.totalorder %s21, 0
      %p298 = por %p296, %p297
      %p299 = scmp.ne.s32.totalorder %s288, %s291
      %p300 = scmp.eq.s32.totalorder %s26, 1
      %p301 = por %p299, %p300
      %p302 = scmp.ne.s32.totalorder %s291, %s292
      %p303 = scmp.eq.s32.totalorder %s26, 0
      %p304 = por %p302, %p303
      %p305 = scmp.ne.s32.totalorder %s291, %s292
      %p306 = scmp.eq.s32.totalorder %s27, 1
      %p307 = por %p305, %p306
      %p309 = scmp.ne.s32.totalorder %s292, %s308
      %p310 = scmp.eq.s32.totalorder %s27, 0
      %p311 = por %p309, %p310
      %p312 = scmp.le.s32.totalorder 1, %s21
      %p313 = scmp.lt.s32.totalorder %s21, 3
      %p314 = pnand %p312, %p313
      %p315 = pneg %p314
      // Predicated region
      $region9: #{tpu_custom_call.1} parent=5 // pred_check
        _
      $region10: #{tpu_custom_call.1} parent=5 // pred_check_branch
        %317 = sbr.rel (%p314) target = $region12
      $region11: #{tpu_custom_call.1} parent=5 // pred_region
        %s318 = ssub.s32 %s21, 1
        // Predicated region
        $region13: #{tpu_custom_call.1} parent=11 // pred_check
          %p319 = pneg %p68
        $region14: #{tpu_custom_call.1} parent=11 // pred_check_branch
          %321 = sbr.rel (%p319) target = $region16
        $region15: #{tpu_custom_call.1} parent=11 // pred_region
          _
        $region16: #{tpu_custom_call.1} parent=11 // pred_fallthru
          _
        // Predicated region
        $region17: #{tpu_custom_call.1} parent=11 // pred_check
          %p322 = pneg %p89
        $region18: #{tpu_custom_call.1} parent=11 // pred_check_branch
          %324 = sbr.rel (%p322) target = $region20
        $region19: #{tpu_custom_call.1} parent=11 // pred_region
          _
        $region20: #{tpu_custom_call.1} parent=11 // pred_fallthru
          _
        // Predicated region
        $region21: #{tpu_custom_call.1} parent=11 // pred_check
          %p325 = pneg %p110
        $region22: #{tpu_custom_call.1} parent=11 // pred_check_branch
          %327 = sbr.rel (%p325) target = $region24
        $region23: #{tpu_custom_call.1} parent=11 // pred_region
          _
        $region24: #{tpu_custom_call.1} parent=11 // pred_fallthru
          _
        // Predicated region
        $region25: #{tpu_custom_call.1} parent=11 // pred_check
          %p328 = pneg %p131
        $region26: #{tpu_custom_call.1} parent=11 // pred_check_branch
          %330 = sbr.rel (%p328) target = $region28
        $region27: #{tpu_custom_call.1} parent=11 // pred_region
          _
        $region28: #{tpu_custom_call.1} parent=11 // pred_fallthru
          _
        // Predicated region
        $region29: #{tpu_custom_call.1} parent=11 // pred_check
          %p331 = pneg %p152
        $region30: #{tpu_custom_call.1} parent=11 // pred_check_branch
          %333 = sbr.rel (%p331) target = $region32
        $region31: #{tpu_custom_call.1} parent=11 // pred_region
          _
        $region32: #{tpu_custom_call.1} parent=11 // pred_fallthru
          _
        // Predicated region
        $region33: #{tpu_custom_call.1} parent=11 // pred_check
          %p334 = pneg %p173
        $region34: #{tpu_custom_call.1} parent=11 // pred_check_branch
          %336 = sbr.rel (%p334) target = $region36
        $region35: #{tpu_custom_call.1} parent=11 // pred_region
          _
        $region36: #{tpu_custom_call.1} parent=11 // pred_fallthru
          _
        // Predicated region
        $region37: #{tpu_custom_call.1} parent=11 // pred_check
          %p337 = pneg %p194
        $region38: #{tpu_custom_call.1} parent=11 // pred_check_branch
          %339 = sbr.rel (%p337) target = $region40
        $region39: #{tpu_custom_call.1} parent=11 // pred_region
          _
        $region40: #{tpu_custom_call.1} parent=11 // pred_fallthru
          _
        // Predicated region
        $region41: #{tpu_custom_call.1} parent=11 // pred_check
          %p340 = pneg %p215
        $region42: #{tpu_custom_call.1} parent=11 // pred_check_branch
          %342 = sbr.rel (%p340) target = $region44
        $region43: #{tpu_custom_call.1} parent=11 // pred_region
          _
        $region44: #{tpu_custom_call.1} parent=11 // pred_fallthru
          _
        // Predicated region
        $region45: #{tpu_custom_call.1} parent=11 // pred_check
          %p343 = pneg %p236
        $region46: #{tpu_custom_call.1} parent=11 // pred_check_branch
          %345 = sbr.rel (%p343) target = $region48
        $region47: #{tpu_custom_call.1} parent=11 // pred_region
          _
        $region48: #{tpu_custom_call.1} parent=11 // pred_fallthru
          _
        // Predicated region
        $region49: #{tpu_custom_call.1} parent=11 // pred_check
          %p346 = pneg %p257
        $region50: #{tpu_custom_call.1} parent=11 // pred_check_branch
          %348 = sbr.rel (%p346) target = $region52
        $region51: #{tpu_custom_call.1} parent=11 // pred_region
          _
        $region52: #{tpu_custom_call.1} parent=11 // pred_fallthru
          _
        // Predicated region
        $region53: #{tpu_custom_call.1} parent=11 // pred_check
          %p349 = pneg %p278
        $region54: #{tpu_custom_call.1} parent=11 // pred_check_branch
          %351 = sbr.rel (%p349) target = $region56
        $region55: #{tpu_custom_call.1} parent=11 // pred_region
          _
        $region56: #{tpu_custom_call.1} parent=11 // pred_fallthru
          _
      $region12: #{tpu_custom_call.1} parent=5 // pred_fallthru
        _
      %p352 = scmp.lt.s32.totalorder %s21, 2
      // Predicated region
      $region57: #{tpu_custom_call.1} parent=5 // pred_check
        %p353 = pneg %p352
      $region58: #{tpu_custom_call.1} parent=5 // pred_check_branch
        %355 = sbr.rel (%p353) target = $region60
      $region59: #{tpu_custom_call.1} parent=5 // pred_region
        // Predicated region
        $region61: #{tpu_custom_call.1} parent=59 // pred_check
          %p356 = pneg %p41
        $region62: #{tpu_custom_call.1} parent=59 // pred_check_branch
          %358 = sbr.rel (%p356) target = $region64
        $region63: #{tpu_custom_call.1} parent=59 // pred_region
          %s359 = smul.u32 4, %s21
          %p360 = scmp.lt.s32.totalorder %s359, 7
          %s361 = scalar_select %p360, %s359, 7
          %s362 = smul.addr %s361, 4
          %s363 = scalar_lea.vmem %s0, %s362
          %s364 = smul.u32 4, %s21
        $region64: #{tpu_custom_call.1} parent=59 // pred_fallthru
          _
      $region60: #{tpu_custom_call.1} parent=5 // pred_fallthru
        _
      %p365 = scmp.le.s32.totalorder 1, %s21
      %p366 = scmp.lt.s32.totalorder %s21, 3
      %p367 = pnand %p365, %p366
      %p368 = pneg %p367
      // Predicated region
      $region65: #{tpu_custom_call.1} parent=5 // pred_check
        _
      $region66: #{tpu_custom_call.1} parent=5 // pred_check_branch
        %370 = sbr.rel (%p367) target = $region68
      $region67: #{tpu_custom_call.1} parent=5 // pred_region
        %s371 = ssub.s32 %s21, 1
        %s372 = smul.u32 4, %s26
        %p373 = scmp.lt.s32.totalorder %s372, 7
        %s374 = scalar_select %p373, %s372, 7
        %s375 = smul.addr %s374, 4
        %s376 = scalar_lea.vmem %s0, %s375
        %p377 = pneg %p47
        %p378 = pneg %p44
        %p379 = pneg %p68
        %p380 = pneg %p65
        %p381 = pneg %p89
        %p382 = pneg %p86
        %p383 = pneg %p110
        %p384 = pneg %p107
        %p385 = pneg %p131
        %p386 = pneg %p128
        %p387 = pneg %p152
        %p388 = pneg %p149
        %p389 = pneg %p173
        %p390 = pneg %p170
        %p391 = pneg %p194
        %p392 = pneg %p191
        %p393 = pneg %p215
        %p394 = pneg %p212
        %p395 = pneg %p236
        %p396 = pneg %p233
        %p397 = pneg %p257
        %p398 = pneg %p254
        %p399 = pneg %p278
        %p400 = pneg %p275
        %p401 = pneg %p304
        %p402 = pneg %p301
        %s403 = sand.u32 %s291, 1
        %s404 = scalar_lea.sflag [#allocation3], %s403
        %s405 = sand.u32 %s291, 1
        %s406 = smul.addr %s405, 64
        %s407 = scalar_lea.vmem [#allocation2], %s406
        %s408 = smul.u32 4, %s26
        %p409 = scmp.lt.s32.totalorder %s408, 7
        %s410 = scalar_select %p409, %s408, 7
        %s411 = smul.addr %s410, 4
        %s412 = scalar_lea.vmem %s0, %s411
        %s413 = smul.u32 4, %s26
        %s414 = smul.u32 4, %s26
        %v415 = vld [vmem:[%s412] sm:$0x77]
        %v416 = vld [vmem:[%s412 + $0x8] sm:$0x77]
        %v417 = vld [vmem:[%s1] sm:$0xff]
        %v418 = vld [vmem:[%s1 + $0x8] sm:$0xff]
        %v419 = vld [vmem:[%s1 + $0x10] sm:$0xff]
        %v420 = vld [vmem:[%s1 + $0x18] sm:$0xff]
        %v421 = vld [vmem:[%s2] sm:$0xff]
        %v422 = vld [vmem:[%s2 + $0x8] sm:$0xff]
        %v423 = vld [vmem:[%s2 + $0x10] sm:$0xff]
        %v424 = vld [vmem:[%s2 + $0x18] sm:$0xff]
        %426 = vset.pattern.permute.xlu0 0
        %427 = vperm.xlu0 %426, %v421
        %v428 = vpop.permute.xlu0 %427
        %431 = vset.pattern.permute.xlu0 0
        %432 = vperm.xlu0 %431, %v422
        %v433 = vpop.permute.xlu0 %432
        %436 = vset.pattern.permute.xlu0 0
        %437 = vperm.xlu0 %436, %v423
        %v438 = vpop.permute.xlu0 %437
        %441 = vset.pattern.permute.xlu0 0
        %442 = vperm.xlu0 %441, %v424
        %v443 = vpop.permute.xlu0 %442
        %v447 = vcombine.high %v415, %v415
        %v448 = vcombine.high %v416, %v416
        %vm449 = vcmask 23552
        %v451 = vsel %vm449, %v417, 0
        %v454 = vsel %vm449, %v418, 0
        %v457 = vsel %vm449, %v419, 0
        %v460 = vsel %vm449, %v420, 0
        %vm462 = vcmask 1042432
        %v463 = vsel %vm462, %v415, 0
        %v465 = vsel %vm462, %v447, 0
        %v467 = vsel %vm462, %v416, 0
        %v469 = vsel %vm462, %v448, 0
        %471 = vmatprep.subr.mxu0 0.0
        %472 = vmatpush1.msra.mxu0 0.0
        %473 = vmatprep.subr.mxu0 0.0
        %474 = vmatpush1.msra.mxu0 0.0
        %475 = vmatprep.subr.mxu0 0.0
        %476 = vmatpush1.msra.mxu0 0.0
        %477 = vmatprep.subr.mxu0 0.0
        %478 = vmatpush1.msra.mxu0 0.0
        %479 = vmatprep.subr.mxu0 0.0
        %480 = vmatpush1.msra.mxu0 0.0
        %481 = vmatprep.subr.mxu0 0.0
        %482 = vmatpush1.msra.mxu0 0.0
        %483 = vmatprep.subr.mxu0 0.0
        %484 = vmatpush1.msra.mxu0 0.0
        %485 = vmatprep.subr.mxu0 0.0
        %486 = vmatpush1.msra.mxu0 0.0
        %487 = vmatprep.subr.mxu0 0.0
        %488 = vmatpush1.msra.mxu0 0.0
        %489 = vmatprep.subr.mxu0 0.0
        %490 = vmatpush1.msra.mxu0 0.0
        %491 = vmatprep.subr.mxu0 0.0
        %492 = vmatpush1.msra.mxu0 0.0
        %493 = vmatprep.subr.mxu0 0.0
        %494 = vmatpush1.msra.mxu0 0.0
        %495 = vmatprep.subr.mxu0 0.0
        %496 = vmatpush1.msra.mxu0 0.0
        %497 = vmatprep.subr.mxu0 0.0
        %498 = vmatpush1.msra.mxu0 0.0
        %499 = vmatprep.subr.mxu0 0.0
        %500 = vmatpush1.msra.mxu0 0.0
        %501 = vmatprep.subr.mxu0 %v465
        %502 = vmatpush1.msra.mxu0 %v463
        %503 = vmatprep.subr.mxu0 0.0
        %504 = vmatpush2.msra.mxu0 0.0
        %505 = vmatprep.subr.mxu0 0.0
        %506 = vmatpush2.msra.mxu0 0.0
        %507 = vmatprep.subr.mxu0 0.0
        %508 = vmatpush2.msra.mxu0 0.0
        %509 = vmatprep.subr.mxu0 0.0
        %510 = vmatpush2.msra.mxu0 0.0
        %511 = vmatprep.subr.mxu0 0.0
        %512 = vmatpush2.msra.mxu0 0.0
        %513 = vmatprep.subr.mxu0 0.0
        %514 = vmatpush2.msra.mxu0 0.0
        %515 = vmatprep.subr.mxu0 0.0
        %516 = vmatpush2.msra.mxu0 0.0
        %517 = vmatprep.subr.mxu0 0.0
        %518 = vmatpush2.msra.mxu0 0.0
        %519 = vmatprep.subr.mxu0 0.0
        %520 = vmatpush2.msra.mxu0 0.0
        %521 = vmatprep.subr.mxu0 0.0
        %522 = vmatpush2.msra.mxu0 0.0
        %523 = vmatprep.subr.mxu0 0.0
        %524 = vmatpush2.msra.mxu0 0.0
        %525 = vmatprep.subr.mxu0 0.0
        %526 = vmatpush2.msra.mxu0 0.0
        %527 = vmatprep.subr.mxu0 0.0
        %528 = vmatpush2.msra.mxu0 0.0
        %529 = vmatprep.subr.mxu0 0.0
        %530 = vmatpush2.msra.mxu0 0.0
        %531 = vmatprep.subr.mxu0 0.0
        %532 = vmatpush2.msra.mxu0 0.0
        %533 = vmatprep.subr.mxu0 0.0
        %534 = vmatpush2.msra.mxu0 0.0
        %535 = vmatprep.mubr.f32.mxu0 0.0
        %536 = vmatmul.mubr.f32.gmra.mxu0 %v451
        %v537 = vpop.f32.mrf.mxu0
        %v538 = vadd.f32 %v428, %v537
        %v539 = vpop.f32.mrf.mxu0
        %v540 = vadd.f32 %v428, %v539
        %541 = vmatprep.mubr.f32.mxu0 0.0
        %542 = vmatmul.mubr.f32.gmra.mxu0 %v454
        %v543 = vpop.f32.mrf.mxu0
        %v544 = vadd.f32 %v433, %v543
        %v545 = vpop.f32.mrf.mxu0
        %v546 = vadd.f32 %v433, %v545
        %547 = vmatprep.mubr.f32.mxu0 0.0
        %548 = vmatmul.mubr.f32.gmra.mxu0 %v457
        %v549 = vpop.f32.mrf.mxu0
        %v550 = vadd.f32 %v438, %v549
        %v551 = vpop.f32.mrf.mxu0
        %v552 = vadd.f32 %v438, %v551
        %553 = vmatprep.mubr.f32.mxu0 0.0
        %554 = vmatmul.mubr.f32.gmra.mxu0 %v460
        %v555 = vpop.f32.mrf.mxu0
        %v556 = vadd.f32 %v443, %v555
        %v557 = vpop.f32.mrf.mxu0
        %v558 = vadd.f32 %v443, %v557
        %559 = vdwg.mxu0
        %560 = vmatprep.subr.mxu0 0.0
        %561 = vmatpush1.msra.mxu0 0.0
        %562 = vmatprep.subr.mxu0 0.0
        %563 = vmatpush1.msra.mxu0 0.0
        %564 = vmatprep.subr.mxu0 0.0
        %565 = vmatpush1.msra.mxu0 0.0
        %566 = vmatprep.subr.mxu0 0.0
        %567 = vmatpush1.msra.mxu0 0.0
        %568 = vmatprep.subr.mxu0 0.0
        %569 = vmatpush1.msra.mxu0 0.0
        %570 = vmatprep.subr.mxu0 0.0
        %571 = vmatpush1.msra.mxu0 0.0
        %572 = vmatprep.subr.mxu0 0.0
        %573 = vmatpush1.msra.mxu0 0.0
        %574 = vmatprep.subr.mxu0 0.0
        %575 = vmatpush1.msra.mxu0 0.0
        %576 = vmatprep.subr.mxu0 0.0
        %577 = vmatpush1.msra.mxu0 0.0
        %578 = vmatprep.subr.mxu0 0.0
        %579 = vmatpush1.msra.mxu0 0.0
        %580 = vmatprep.subr.mxu0 0.0
        %581 = vmatpush1.msra.mxu0 0.0
        %582 = vmatprep.subr.mxu0 0.0
        %583 = vmatpush1.msra.mxu0 0.0
        %584 = vmatprep.subr.mxu0 0.0
        %585 = vmatpush1.msra.mxu0 0.0
        %586 = vmatprep.subr.mxu0 0.0
        %587 = vmatpush1.msra.mxu0 0.0
        %588 = vmatprep.subr.mxu0 0.0
        %589 = vmatpush1.msra.mxu0 0.0
        %590 = vmatprep.subr.mxu0 %v469
        %591 = vmatpush1.msra.mxu0 %v467
        %592 = vmatprep.subr.mxu0 0.0
        %593 = vmatpush2.msra.mxu0 0.0
        %594 = vmatprep.subr.mxu0 0.0
        %595 = vmatpush2.msra.mxu0 0.0
        %596 = vmatprep.subr.mxu0 0.0
        %597 = vmatpush2.msra.mxu0 0.0
        %598 = vmatprep.subr.mxu0 0.0
        %599 = vmatpush2.msra.mxu0 0.0
        %600 = vmatprep.subr.mxu0 0.0
        %601 = vmatpush2.msra.mxu0 0.0
        %602 = vmatprep.subr.mxu0 0.0
        %603 = vmatpush2.msra.mxu0 0.0
        %604 = vmatprep.subr.mxu0 0.0
        %605 = vmatpush2.msra.mxu0 0.0
        %606 = vmatprep.subr.mxu0 0.0
        %607 = vmatpush2.msra.mxu0 0.0
        %608 = vmatprep.subr.mxu0 0.0
        %609 = vmatpush2.msra.mxu0 0.0
        %610 = vmatprep.subr.mxu0 0.0
        %611 = vmatpush2.msra.mxu0 0.0
        %612 = vmatprep.subr.mxu0 0.0
        %613 = vmatpush2.msra.mxu0 0.0
        %614 = vmatprep.subr.mxu0 0.0
        %615 = vmatpush2.msra.mxu0 0.0
        %616 = vmatprep.subr.mxu0 0.0
        %617 = vmatpush2.msra.mxu0 0.0
        %618 = vmatprep.subr.mxu0 0.0
        %619 = vmatpush2.msra.mxu0 0.0
        %620 = vmatprep.subr.mxu0 0.0
        %621 = vmatpush2.msra.mxu0 0.0
        %622 = vmatprep.subr.mxu0 0.0
        %623 = vmatpush2.msra.mxu0 0.0
        %624 = vmatprep.mubr.f32.mxu0 0.0
        %625 = vmatmul.mubr.f32.gmra.mxu0 %v451
        %v626 = vpop.f32.mrf.mxu0
        %v627 = vadd.f32 %v428, %v626
        %v628 = vpop.f32.mrf.mxu0
        %v629 = vadd.f32 %v428, %v628
        %630 = vmatprep.mubr.f32.mxu0 0.0
        %631 = vmatmul.mubr.f32.gmra.mxu0 %v454
        %v632 = vpop.f32.mrf.mxu0
        %v633 = vadd.f32 %v433, %v632
        %v634 = vpop.f32.mrf.mxu0
        %v635 = vadd.f32 %v433, %v634
        %636 = vmatprep.mubr.f32.mxu0 0.0
        %637 = vmatmul.mubr.f32.gmra.mxu0 %v457
        %v638 = vpop.f32.mrf.mxu0
        %v639 = vadd.f32 %v438, %v638
        %v640 = vpop.f32.mrf.mxu0
        %v641 = vadd.f32 %v438, %v640
        %642 = vmatprep.mubr.f32.mxu0 0.0
        %643 = vmatmul.mubr.f32.gmra.mxu0 %v460
        %v644 = vpop.f32.mrf.mxu0
        %v645 = vadd.f32 %v443, %v644
        %v646 = vpop.f32.mrf.mxu0
        %v647 = vadd.f32 %v443, %v646
        %648 = vdwg.mxu0
        %v649 = vmul.f32 %v538, 100.0
        %v650 = vmul.f32 %v540, 100.0
        %v651 = vmul.f32 %v627, 100.0
        %v652 = vmul.f32 %v629, 100.0
        %v653 = vmul.f32 %v544, 100.0
        %v654 = vmul.f32 %v546, 100.0
        %v655 = vmul.f32 %v633, 100.0
        %v656 = vmul.f32 %v635, 100.0
        %v657 = vmul.f32 %v550, 100.0
        %v658 = vmul.f32 %v552, 100.0
        %v659 = vmul.f32 %v639, 100.0
        %v660 = vmul.f32 %v641, 100.0
        %v661 = vmul.f32 %v556, 100.0
        %v662 = vmul.f32 %v558, 100.0
        %v663 = vmul.f32 %v645, 100.0
        %v664 = vmul.f32 %v647, 100.0
        %v665 = vmin.f32 %v649, 20.0
        %v666 = vmin.f32 %v650, 20.0
        %v667 = vmin.f32 %v651, 20.0
        %v668 = vmin.f32 %v652, 20.0
        %v669 = vmin.f32 %v653, 20.0
        %v670 = vmin.f32 %v654, 20.0
        %v671 = vmin.f32 %v655, 20.0
        %v672 = vmin.f32 %v656, 20.0
        %v673 = vmin.f32 %v657, 20.0
        %v674 = vmin.f32 %v658, 20.0
        %v675 = vmin.f32 %v659, 20.0
        %v676 = vmin.f32 %v660, 20.0
        %v677 = vmin.f32 %v661, 20.0
        %v678 = vmin.f32 %v662, 20.0
        %v679 = vmin.f32 %v663, 20.0
        %v680 = vmin.f32 %v664, 20.0
        %vm681 = vcmp.gt.f32.partialorder %v649, 20.0
        %vm682 = vcmp.gt.f32.partialorder %v650, 20.0
        %vm683 = vcmp.gt.f32.partialorder %v651, 20.0
        %vm684 = vcmp.gt.f32.partialorder %v652, 20.0
        %vm685 = vcmp.gt.f32.partialorder %v653, 20.0
        %vm686 = vcmp.gt.f32.partialorder %v654, 20.0
        %vm687 = vcmp.gt.f32.partialorder %v655, 20.0
        %vm688 = vcmp.gt.f32.partialorder %v656, 20.0
        %vm689 = vcmp.gt.f32.partialorder %v657, 20.0
        %vm690 = vcmp.gt.f32.partialorder %v658, 20.0
        %vm691 = vcmp.gt.f32.partialorder %v659, 20.0
        %vm692 = vcmp.gt.f32.partialorder %v660, 20.0
        %vm693 = vcmp.gt.f32.partialorder %v661, 20.0
        %vm694 = vcmp.gt.f32.partialorder %v662, 20.0
        %vm695 = vcmp.gt.f32.partialorder %v663, 20.0
        %vm696 = vcmp.gt.f32.partialorder %v664, 20.0
        %v697 = vmul.f32 %v665, 1.442695
        %v698 = vpow.pop %v697
        %v699 = vmul.f32 %v666, 1.442695
        %v700 = vpow.pop %v699
        %v701 = vmul.f32 %v667, 1.442695
        %v702 = vpow.pop %v701
        %v703 = vmul.f32 %v668, 1.442695
        %v704 = vpow.pop %v703
        %v705 = vmul.f32 %v669, 1.442695
        %v706 = vpow.pop %v705
        %v707 = vmul.f32 %v670, 1.442695
        %v708 = vpow.pop %v707
        %v709 = vmul.f32 %v671, 1.442695
        %v710 = vpow.pop %v709
        %v711 = vmul.f32 %v672, 1.442695
        %v712 = vpow.pop %v711
        %v713 = vmul.f32 %v673, 1.442695
        %v714 = vpow.pop %v713
        %v715 = vmul.f32 %v674, 1.442695
        %v716 = vpow.pop %v715
        %v717 = vmul.f32 %v675, 1.442695
        %v718 = vpow.pop %v717
        %v719 = vmul.f32 %v676, 1.442695
        %v720 = vpow.pop %v719
        %v721 = vmul.f32 %v677, 1.442695
        %v722 = vpow.pop %v721
        %v723 = vmul.f32 %v678, 1.442695
        %v724 = vpow.pop %v723
        %v725 = vmul.f32 %v679, 1.442695
        %v726 = vpow.pop %v725
        %v727 = vmul.f32 %v680, 1.442695
        %v728 = vpow.pop %v727
        %v729 = vadd.f32 %v698, 1.0
        %v730 = vlog2.pop %v729
        %v731 = vmul.f32 %v730, 0.6931472
        %v732 = vmul.f32 -0.5, %v698
        %v733 = vadd.f32 %v732, 1.0
        %v734 = vmul.f32 %v733, %v698
        %v735 = vand.u32 2147483647, %v698
        %vm736 = vcmp.lt.f32.partialorder %v735, 0.0004427343
        %v737 = vsel %vm736, %v734, %v731
        %v738 = vadd.f32 %v700, 1.0
        %v739 = vlog2.pop %v738
        %v740 = vmul.f32 %v739, 0.6931472
        %v741 = vmul.f32 -0.5, %v700
        %v742 = vadd.f32 %v741, 1.0
        %v743 = vmul.f32 %v742, %v700
        %v744 = vand.u32 2147483647, %v700
        %vm745 = vcmp.lt.f32.partialorder %v744, 0.0004427343
        %v746 = vsel %vm745, %v743, %v740
        %v747 = vadd.f32 %v702, 1.0
        %v748 = vlog2.pop %v747
        %v749 = vmul.f32 %v748, 0.6931472
        %v750 = vmul.f32 -0.5, %v702
        %v751 = vadd.f32 %v750, 1.0
        %v752 = vmul.f32 %v751, %v702
        %v753 = vand.u32 2147483647, %v702
        %vm754 = vcmp.lt.f32.partialorder %v753, 0.0004427343
        %v755 = vsel %vm754, %v752, %v749
        %v756 = vadd.f32 %v704, 1.0
        %v757 = vlog2.pop %v756
        %v758 = vmul.f32 %v757, 0.6931472
        %v759 = vmul.f32 -0.5, %v704
        %v760 = vadd.f32 %v759, 1.0
        %v761 = vmul.f32 %v760, %v704
        %v762 = vand.u32 2147483647, %v704
        %vm763 = vcmp.lt.f32.partialorder %v762, 0.0004427343
        %v764 = vsel %vm763, %v761, %v758
        %v765 = vadd.f32 %v706, 1.0
        %v766 = vlog2.pop %v765
        %v767 = vmul.f32 %v766, 0.6931472
        %v768 = vmul.f32 -0.5, %v706
        %v769 = vadd.f32 %v768, 1.0
        %v770 = vmul.f32 %v769, %v706
        %v771 = vand.u32 2147483647, %v706
        %vm772 = vcmp.lt.f32.partialorder %v771, 0.0004427343
        %v773 = vsel %vm772, %v770, %v767
        %v774 = vadd.f32 %v708, 1.0
        %v775 = vlog2.pop %v774
        %v776 = vmul.f32 %v775, 0.6931472
        %v777 = vmul.f32 -0.5, %v708
        %v778 = vadd.f32 %v777, 1.0
        %v779 = vmul.f32 %v778, %v708
        %v780 = vand.u32 2147483647, %v708
        %vm781 = vcmp.lt.f32.partialorder %v780, 0.0004427343
        %v782 = vsel %vm781, %v779, %v776
        %v783 = vadd.f32 %v710, 1.0
        %v784 = vlog2.pop %v783
        %v785 = vmul.f32 %v784, 0.6931472
        %v786 = vmul.f32 -0.5, %v710
        %v787 = vadd.f32 %v786, 1.0
        %v788 = vmul.f32 %v787, %v710
        %v789 = vand.u32 2147483647, %v710
        %vm790 = vcmp.lt.f32.partialorder %v789, 0.0004427343
        %v791 = vsel %vm790, %v788, %v785
        %v792 = vadd.f32 %v712, 1.0
        %v793 = vlog2.pop %v792
        %v794 = vmul.f32 %v793, 0.6931472
        %v795 = vmul.f32 -0.5, %v712
        %v796 = vadd.f32 %v795, 1.0
        %v797 = vmul.f32 %v796, %v712
        %v798 = vand.u32 2147483647, %v712
        %vm799 = vcmp.lt.f32.partialorder %v798, 0.0004427343
        %v800 = vsel %vm799, %v797, %v794
        %v801 = vadd.f32 %v714, 1.0
        %v802 = vlog2.pop %v801
        %v803 = vmul.f32 %v802, 0.6931472
        %v804 = vmul.f32 -0.5, %v714
        %v805 = vadd.f32 %v804, 1.0
        %v806 = vmul.f32 %v805, %v714
        %v807 = vand.u32 2147483647, %v714
        %vm808 = vcmp.lt.f32.partialorder %v807, 0.0004427343
        %v809 = vsel %vm808, %v806, %v803
        %v810 = vadd.f32 %v716, 1.0
        %v811 = vlog2.pop %v810
        %v812 = vmul.f32 %v811, 0.6931472
        %v813 = vmul.f32 -0.5, %v716
        %v814 = vadd.f32 %v813, 1.0
        %v815 = vmul.f32 %v814, %v716
        %v816 = vand.u32 2147483647, %v716
        %vm817 = vcmp.lt.f32.partialorder %v816, 0.0004427343
        %v818 = vsel %vm817, %v815, %v812
        %v819 = vadd.f32 %v718, 1.0
        %v820 = vlog2.pop %v819
        %v821 = vmul.f32 %v820, 0.6931472
        %v822 = vmul.f32 -0.5, %v718
        %v823 = vadd.f32 %v822, 1.0
        %v824 = vmul.f32 %v823, %v718
        %v825 = vand.u32 2147483647, %v718
        %vm826 = vcmp.lt.f32.partialorder %v825, 0.0004427343
        %v827 = vsel %vm826, %v824, %v821
        %v828 = vadd.f32 %v720, 1.0
        %v829 = vlog2.pop %v828
        %v830 = vmul.f32 %v829, 0.6931472
        %v831 = vmul.f32 -0.5, %v720
        %v832 = vadd.f32 %v831, 1.0
        %v833 = vmul.f32 %v832, %v720
        %v834 = vand.u32 2147483647, %v720
        %vm835 = vcmp.lt.f32.partialorder %v834, 0.0004427343
        %v836 = vsel %vm835, %v833, %v830
        %v837 = vadd.f32 %v722, 1.0
        %v838 = vlog2.pop %v837
        %v839 = vmul.f32 %v838, 0.6931472
        %v840 = vmul.f32 -0.5, %v722
        %v841 = vadd.f32 %v840, 1.0
        %v842 = vmul.f32 %v841, %v722
        %v843 = vand.u32 2147483647, %v722
        %vm844 = vcmp.lt.f32.partialorder %v843, 0.0004427343
        %v845 = vsel %vm844, %v842, %v839
        %v846 = vadd.f32 %v724, 1.0
        %v847 = vlog2.pop %v846
        %v848 = vmul.f32 %v847, 0.6931472
        %v849 = vmul.f32 -0.5, %v724
        %v850 = vadd.f32 %v849, 1.0
        %v851 = vmul.f32 %v850, %v724
        %v852 = vand.u32 2147483647, %v724
        %vm853 = vcmp.lt.f32.partialorder %v852, 0.0004427343
        %v854 = vsel %vm853, %v851, %v848
        %v855 = vadd.f32 %v726, 1.0
        %v856 = vlog2.pop %v855
        %v857 = vmul.f32 %v856, 0.6931472
        %v858 = vmul.f32 -0.5, %v726
        %v859 = vadd.f32 %v858, 1.0
        %v860 = vmul.f32 %v859, %v726
        %v861 = vand.u32 2147483647, %v726
        %vm862 = vcmp.lt.f32.partialorder %v861, 0.0004427343
        %v863 = vsel %vm862, %v860, %v857
        %v864 = vadd.f32 %v728, 1.0
        %v865 = vlog2.pop %v864
        %v866 = vmul.f32 %v865, 0.6931472
        %v867 = vmul.f32 -0.5, %v728
        %v868 = vadd.f32 %v867, 1.0
        %v869 = vmul.f32 %v868, %v728
        %v870 = vand.u32 2147483647, %v728
        %vm871 = vcmp.lt.f32.partialorder %v870, 0.0004427343
        %v872 = vsel %vm871, %v869, %v866
        %v873 = vrcp.pop 100.0
        %v874 = vmul.f32 %v737, %v873
        %v875 = vmul.f32 %v746, %v873
        %v876 = vmul.f32 %v755, %v873
        %v877 = vmul.f32 %v764, %v873
        %v878 = vmul.f32 %v773, %v873
        %v879 = vmul.f32 %v782, %v873
        %v880 = vmul.f32 %v791, %v873
        %v881 = vmul.f32 %v800, %v873
        %v882 = vmul.f32 %v809, %v873
        %v883 = vmul.f32 %v818, %v873
        %v884 = vmul.f32 %v827, %v873
        %v885 = vmul.f32 %v836, %v873
        %v886 = vmul.f32 %v845, %v873
        %v887 = vmul.f32 %v854, %v873
        %v888 = vmul.f32 %v863, %v873
        %v889 = vmul.f32 %v872, %v873
        %v890 = vsel %vm681, %v538, %v874
        %v891 = vsel %vm682, %v540, %v875
        %v892 = vsel %vm683, %v627, %v876
        %v893 = vsel %vm684, %v629, %v877
        %v894 = vsel %vm685, %v544, %v878
        %v895 = vsel %vm686, %v546, %v879
        %v896 = vsel %vm687, %v633, %v880
        %v897 = vsel %vm688, %v635, %v881
        %v898 = vsel %vm689, %v550, %v882
        %v899 = vsel %vm690, %v552, %v883
        %v900 = vsel %vm691, %v639, %v884
        %v901 = vsel %vm692, %v641, %v885
        %v902 = vsel %vm693, %v556, %v886
        %v903 = vsel %vm694, %v558, %v887
        %v904 = vsel %vm695, %v645, %v888
        %v905 = vsel %vm696, %v647, %v889
        %v906 = vld [vmem:[%s3] sm:$0xff]
        %v907 = vld [vmem:[%s3 + $0x8] sm:$0xff]
        %v908 = vld [vmem:[%s3 + $0x10] sm:$0xff]
        %v909 = vld [vmem:[%s3 + $0x18] sm:$0x1f]
        %v910 = vld [vmem:[%s4] sm:$0xff]
        %v911 = vld [vmem:[%s4 + $0x8] sm:$0xff]
        %v912 = vld [vmem:[%s4 + $0x10] sm:$0xff]
        %v913 = vld [vmem:[%s4 + $0x18] sm:$0x1f]
        %915 = vset.pattern.permute.xlu0 0
        %916 = vperm.xlu0 %915, %v910
        %v917 = vpop.permute.xlu0 %916
        %920 = vset.pattern.permute.xlu0 0
        %921 = vperm.xlu0 %920, %v911
        %v922 = vpop.permute.xlu0 %921
        %925 = vset.pattern.permute.xlu0 0
        %926 = vperm.xlu0 %925, %v912
        %v927 = vpop.permute.xlu0 %926
        %930 = vset.pattern.permute.xlu0 0
        %931 = vperm.xlu0 %930, %v913
        %v932 = vpop.permute.xlu0 %931
        %vm934 = vcmask 261120
        %v936 = vsel %vm934, %v906, 0
        %v939 = vsel %vm934, %v907, 0
        %v942 = vsel %vm934, %v908, 0
        %v945 = vsel %vm934, %v909, 0
        %947 = vmatprep.subr.mxu0 0.0
        %948 = vmatpush1.msra.mxu0 0.0
        %949 = vmatprep.subr.mxu0 0.0
        %950 = vmatpush1.msra.mxu0 0.0
        %951 = vmatprep.subr.mxu0 0.0
        %952 = vmatpush1.msra.mxu0 0.0
        %953 = vmatprep.subr.mxu0 0.0
        %954 = vmatpush1.msra.mxu0 0.0
        %955 = vmatprep.subr.mxu0 0.0
        %956 = vmatpush1.msra.mxu0 0.0
        %957 = vmatprep.subr.mxu0 0.0
        %958 = vmatpush1.msra.mxu0 0.0
        %959 = vmatprep.subr.mxu0 0.0
        %960 = vmatpush1.msra.mxu0 0.0
        %961 = vmatprep.subr.mxu0 0.0
        %962 = vmatpush1.msra.mxu0 0.0
        %963 = vmatprep.subr.mxu0 0.0
        %964 = vmatpush1.msra.mxu0 0.0
        %965 = vmatprep.subr.mxu0 0.0
        %966 = vmatpush1.msra.mxu0 0.0
        %967 = vmatprep.subr.mxu0 0.0
        %968 = vmatpush1.msra.mxu0 0.0
        %969 = vmatprep.subr.mxu0 0.0
        %970 = vmatpush1.msra.mxu0 0.0
        %971 = vmatprep.subr.mxu0 %v903
        %972 = vmatpush1.msra.mxu0 %v902
        %973 = vmatprep.subr.mxu0 %v899
        %974 = vmatpush1.msra.mxu0 %v898
        %975 = vmatprep.subr.mxu0 %v895
        %976 = vmatpush1.msra.mxu0 %v894
        %977 = vmatprep.subr.mxu0 %v891
        %978 = vmatpush1.msra.mxu0 %v890
        %979 = vmatprep.subr.mxu0 0.0
        %980 = vmatpush2.msra.mxu0 0.0
        %981 = vmatprep.subr.mxu0 0.0
        %982 = vmatpush2.msra.mxu0 0.0
        %983 = vmatprep.subr.mxu0 0.0
        %984 = vmatpush2.msra.mxu0 0.0
        %985 = vmatprep.subr.mxu0 0.0
        %986 = vmatpush2.msra.mxu0 0.0
        %987 = vmatprep.subr.mxu0 0.0
        %988 = vmatpush2.msra.mxu0 0.0
        %989 = vmatprep.subr.mxu0 0.0
        %990 = vmatpush2.msra.mxu0 0.0
        %991 = vmatprep.subr.mxu0 0.0
        %992 = vmatpush2.msra.mxu0 0.0
        %993 = vmatprep.subr.mxu0 0.0
        %994 = vmatpush2.msra.mxu0 0.0
        %995 = vmatprep.subr.mxu0 0.0
        %996 = vmatpush2.msra.mxu0 0.0
        %997 = vmatprep.subr.mxu0 0.0
        %998 = vmatpush2.msra.mxu0 0.0
        %999 = vmatprep.subr.mxu0 0.0
        %1000 = vmatpush2.msra.mxu0 0.0
        %1001 = vmatprep.subr.mxu0 0.0
        %1002 = vmatpush2.msra.mxu0 0.0
        %1003 = vmatprep.subr.mxu0 0.0
        %1004 = vmatpush2.msra.mxu0 0.0
        %1005 = vmatprep.subr.mxu0 0.0
        %1006 = vmatpush2.msra.mxu0 0.0
        %1007 = vmatprep.subr.mxu0 0.0
        %1008 = vmatpush2.msra.mxu0 0.0
        %1009 = vmatprep.subr.mxu0 0.0
        %1010 = vmatpush2.msra.mxu0 0.0
        %1011 = vmatprep.mubr.f32.mxu0 0.0
        %1012 = vmatmul.mubr.f32.gmra.mxu0 %v936
        %v1013 = vpop.f32.mrf.mxu0
        %v1014 = vadd.f32 %v917, %v1013
        %v1015 = vpop.f32.mrf.mxu0
        %v1016 = vadd.f32 %v917, %v1015
        %1017 = vmatprep.mubr.f32.mxu0 0.0
        %1018 = vmatmul.mubr.f32.gmra.mxu0 %v939
        %v1019 = vpop.f32.mrf.mxu0
        %v1020 = vadd.f32 %v922, %v1019
        %v1021 = vpop.f32.mrf.mxu0
        %v1022 = vadd.f32 %v922, %v1021
        %1023 = vmatprep.mubr.f32.mxu0 0.0
        %1024 = vmatmul.mubr.f32.gmra.mxu0 %v942
        %v1025 = vpop.f32.mrf.mxu0
        %v1026 = vadd.f32 %v927, %v1025
        %v1027 = vpop.f32.mrf.mxu0
        %v1028 = vadd.f32 %v927, %v1027
        %1029 = vmatprep.mubr.f32.mxu0 0.0
        %1030 = vmatmul.mubr.f32.gmra.mxu0 %v945
        %v1031 = vpop.f32.mrf.mxu0
        %v1032 = vadd.f32 %v932, %v1031
        %v1033 = vpop.f32.mrf.mxu0
        %v1034 = vadd.f32 %v932, %v1033
        %1035 = vdwg.mxu0
        %1036 = vmatprep.subr.mxu0 0.0
        %1037 = vmatpush1.msra.mxu0 0.0
        %1038 = vmatprep.subr.mxu0 0.0
        %1039 = vmatpush1.msra.mxu0 0.0
        %1040 = vmatprep.subr.mxu0 0.0
        %1041 = vmatpush1.msra.mxu0 0.0
        %1042 = vmatprep.subr.mxu0 0.0
        %1043 = vmatpush1.msra.mxu0 0.0
        %1044 = vmatprep.subr.mxu0 0.0
        %1045 = vmatpush1.msra.mxu0 0.0
        %1046 = vmatprep.subr.mxu0 0.0
        %1047 = vmatpush1.msra.mxu0 0.0
        %1048 = vmatprep.subr.mxu0 0.0
        %1049 = vmatpush1.msra.mxu0 0.0
        %1050 = vmatprep.subr.mxu0 0.0
        %1051 = vmatpush1.msra.mxu0 0.0
        %1052 = vmatprep.subr.mxu0 0.0
        %1053 = vmatpush1.msra.mxu0 0.0
        %1054 = vmatprep.subr.mxu0 0.0
        %1055 = vmatpush1.msra.mxu0 0.0
        %1056 = vmatprep.subr.mxu0 0.0
        %1057 = vmatpush1.msra.mxu0 0.0
        %1058 = vmatprep.subr.mxu0 0.0
        %1059 = vmatpush1.msra.mxu0 0.0
        %1060 = vmatprep.subr.mxu0 %v905
        %1061 = vmatpush1.msra.mxu0 %v904
        %1062 = vmatprep.subr.mxu0 %v901
        %1063 = vmatpush1.msra.mxu0 %v900
        %1064 = vmatprep.subr.mxu0 %v897
        %1065 = vmatpush1.msra.mxu0 %v896
        %1066 = vmatprep.subr.mxu0 %v893
        %1067 = vmatpush1.msra.mxu0 %v892
        %1068 = vmatprep.subr.mxu0 0.0
        %1069 = vmatpush2.msra.mxu0 0.0
        %1070 = vmatprep.subr.mxu0 0.0
        %1071 = vmatpush2.msra.mxu0 0.0
        %1072 = vmatprep.subr.mxu0 0.0
        %1073 = vmatpush2.msra.mxu0 0.0
        %1074 = vmatprep.subr.mxu0 0.0
        %1075 = vmatpush2.msra.mxu0 0.0
        %1076 = vmatprep.subr.mxu0 0.0
        %1077 = vmatpush2.msra.mxu0 0.0
        %1078 = vmatprep.subr.mxu0 0.0
        %1079 = vmatpush2.msra.mxu0 0.0
        %1080 = vmatprep.subr.mxu0 0.0
        %1081 = vmatpush2.msra.mxu0 0.0
        %1082 = vmatprep.subr.mxu0 0.0
        %1083 = vmatpush2.msra.mxu0 0.0
        %1084 = vmatprep.subr.mxu0 0.0
        %1085 = vmatpush2.msra.mxu0 0.0
        %1086 = vmatprep.subr.mxu0 0.0
        %1087 = vmatpush2.msra.mxu0 0.0
        %1088 = vmatprep.subr.mxu0 0.0
        %1089 = vmatpush2.msra.mxu0 0.0
        %1090 = vmatprep.subr.mxu0 0.0
        %1091 = vmatpush2.msra.mxu0 0.0
        %1092 = vmatprep.subr.mxu0 0.0
        %1093 = vmatpush2.msra.mxu0 0.0
        %1094 = vmatprep.subr.mxu0 0.0
        %1095 = vmatpush2.msra.mxu0 0.0
        %1096 = vmatprep.subr.mxu0 0.0
        %1097 = vmatpush2.msra.mxu0 0.0
        %1098 = vmatprep.subr.mxu0 0.0
        %1099 = vmatpush2.msra.mxu0 0.0
        %1100 = vmatprep.mubr.f32.mxu0 0.0
        %1101 = vmatmul.mubr.f32.gmra.mxu0 %v936
        %v1102 = vpop.f32.mrf.mxu0
        %v1103 = vadd.f32 %v917, %v1102
        %v1104 = vpop.f32.mrf.mxu0
        %v1105 = vadd.f32 %v917, %v1104
        %1106 = vmatprep.mubr.f32.mxu0 0.0
        %1107 = vmatmul.mubr.f32.gmra.mxu0 %v939
        %v1108 = vpop.f32.mrf.mxu0
        %v1109 = vadd.f32 %v922, %v1108
        %v1110 = vpop.f32.mrf.mxu0
        %v1111 = vadd.f32 %v922, %v1110
        %1112 = vmatprep.mubr.f32.mxu0 0.0
        %1113 = vmatmul.mubr.f32.gmra.mxu0 %v942
        %v1114 = vpop.f32.mrf.mxu0
        %v1115 = vadd.f32 %v927, %v1114
        %v1116 = vpop.f32.mrf.mxu0
        %v1117 = vadd.f32 %v927, %v1116
        %1118 = vmatprep.mubr.f32.mxu0 0.0
        %1119 = vmatmul.mubr.f32.gmra.mxu0 %v945
        %v1120 = vpop.f32.mrf.mxu0
        %v1121 = vadd.f32 %v932, %v1120
        %v1122 = vpop.f32.mrf.mxu0
        %v1123 = vadd.f32 %v932, %v1122
        %1124 = vdwg.mxu0
        %v1125 = vmul.f32 %v1014, 100.0
        %v1126 = vmul.f32 %v1016, 100.0
        %v1127 = vmul.f32 %v1103, 100.0
        %v1128 = vmul.f32 %v1105, 100.0
        %v1129 = vmul.f32 %v1020, 100.0
        %v1130 = vmul.f32 %v1022, 100.0
        %v1131 = vmul.f32 %v1109, 100.0
        %v1132 = vmul.f32 %v1111, 100.0
        %v1133 = vmul.f32 %v1026, 100.0
        %v1134 = vmul.f32 %v1028, 100.0
        %v1135 = vmul.f32 %v1115, 100.0
        %v1136 = vmul.f32 %v1117, 100.0
        %v1137 = vmul.f32 %v1032, 100.0
        %v1138 = vmul.f32 %v1034, 100.0
        %v1139 = vmul.f32 %v1121, 100.0
        %v1140 = vmul.f32 %v1123, 100.0
        %v1141 = vmin.f32 %v1125, 20.0
        %v1142 = vmin.f32 %v1126, 20.0
        %v1143 = vmin.f32 %v1127, 20.0
        %v1144 = vmin.f32 %v1128, 20.0
        %v1145 = vmin.f32 %v1129, 20.0
        %v1146 = vmin.f32 %v1130, 20.0
        %v1147 = vmin.f32 %v1131, 20.0
        %v1148 = vmin.f32 %v1132, 20.0
        %v1149 = vmin.f32 %v1133, 20.0
        %v1150 = vmin.f32 %v1134, 20.0
        %v1151 = vmin.f32 %v1135, 20.0
        %v1152 = vmin.f32 %v1136, 20.0
        %v1153 = vmin.f32 %v1137, 20.0
        %v1154 = vmin.f32 %v1138, 20.0
        %v1155 = vmin.f32 %v1139, 20.0
        %v1156 = vmin.f32 %v1140, 20.0
        %vm1157 = vcmp.gt.f32.partialorder %v1125, 20.0
        %vm1158 = vcmp.gt.f32.partialorder %v1126, 20.0
        %vm1159 = vcmp.gt.f32.partialorder %v1127, 20.0
        %vm1160 = vcmp.gt.f32.partialorder %v1128, 20.0
        %vm1161 = vcmp.gt.f32.partialorder %v1129, 20.0
        %vm1162 = vcmp.gt.f32.partialorder %v1130, 20.0
        %vm1163 = vcmp.gt.f32.partialorder %v1131, 20.0
        %vm1164 = vcmp.gt.f32.partialorder %v1132, 20.0
        %vm1165 = vcmp.gt.f32.partialorder %v1133, 20.0
        %vm1166 = vcmp.gt.f32.partialorder %v1134, 20.0
        %vm1167 = vcmp.gt.f32.partialorder %v1135, 20.0
        %vm1168 = vcmp.gt.f32.partialorder %v1136, 20.0
        %vm1169 = vcmp.gt.f32.partialorder %v1137, 20.0
        %vm1170 = vcmp.gt.f32.partialorder %v1138, 20.0
        %vm1171 = vcmp.gt.f32.partialorder %v1139, 20.0
        %vm1172 = vcmp.gt.f32.partialorder %v1140, 20.0
        %v1173 = vmul.f32 %v1141, 1.442695
        %v1174 = vpow.pop %v1173
        %v1175 = vmul.f32 %v1142, 1.442695
        %v1176 = vpow.pop %v1175
        %v1177 = vmul.f32 %v1143, 1.442695
        %v1178 = vpow.pop %v1177
        %v1179 = vmul.f32 %v1144, 1.442695
        %v1180 = vpow.pop %v1179
        %v1181 = vmul.f32 %v1145, 1.442695
        %v1182 = vpow.pop %v1181
        %v1183 = vmul.f32 %v1146, 1.442695
        %v1184 = vpow.pop %v1183
        %v1185 = vmul.f32 %v1147, 1.442695
        %v1186 = vpow.pop %v1185
        %v1187 = vmul.f32 %v1148, 1.442695
        %v1188 = vpow.pop %v1187
        %v1189 = vmul.f32 %v1149, 1.442695
        %v1190 = vpow.pop %v1189
        %v1191 = vmul.f32 %v1150, 1.442695
        %v1192 = vpow.pop %v1191
        %v1193 = vmul.f32 %v1151, 1.442695
        %v1194 = vpow.pop %v1193
        %v1195 = vmul.f32 %v1152, 1.442695
        %v1196 = vpow.pop %v1195
        %v1197 = vmul.f32 %v1153, 1.442695
        %v1198 = vpow.pop %v1197
        %v1199 = vmul.f32 %v1154, 1.442695
        %v1200 = vpow.pop %v1199
        %v1201 = vmul.f32 %v1155, 1.442695
        %v1202 = vpow.pop %v1201
        %v1203 = vmul.f32 %v1156, 1.442695
        %v1204 = vpow.pop %v1203
        %v1205 = vadd.f32 %v1174, 1.0
        %v1206 = vlog2.pop %v1205
        %v1207 = vmul.f32 %v1206, 0.6931472
        %v1208 = vmul.f32 -0.5, %v1174
        %v1209 = vadd.f32 %v1208, 1.0
        %v1210 = vmul.f32 %v1209, %v1174
        %v1211 = vand.u32 2147483647, %v1174
        %vm1212 = vcmp.lt.f32.partialorder %v1211, 0.0004427343
        %v1213 = vsel %vm1212, %v1210, %v1207
        %v1214 = vadd.f32 %v1176, 1.0
        %v1215 = vlog2.pop %v1214
        %v1216 = vmul.f32 %v1215, 0.6931472
        %v1217 = vmul.f32 -0.5, %v1176
        %v1218 = vadd.f32 %v1217, 1.0
        %v1219 = vmul.f32 %v1218, %v1176
        %v1220 = vand.u32 2147483647, %v1176
        %vm1221 = vcmp.lt.f32.partialorder %v1220, 0.0004427343
        %v1222 = vsel %vm1221, %v1219, %v1216
        %v1223 = vadd.f32 %v1178, 1.0
        %v1224 = vlog2.pop %v1223
        %v1225 = vmul.f32 %v1224, 0.6931472
        %v1226 = vmul.f32 -0.5, %v1178
        %v1227 = vadd.f32 %v1226, 1.0
        %v1228 = vmul.f32 %v1227, %v1178
        %v1229 = vand.u32 2147483647, %v1178
        %vm1230 = vcmp.lt.f32.partialorder %v1229, 0.0004427343
        %v1231 = vsel %vm1230, %v1228, %v1225
        %v1232 = vadd.f32 %v1180, 1.0
        %v1233 = vlog2.pop %v1232
        %v1234 = vmul.f32 %v1233, 0.6931472
        %v1235 = vmul.f32 -0.5, %v1180
        %v1236 = vadd.f32 %v1235, 1.0
        %v1237 = vmul.f32 %v1236, %v1180
        %v1238 = vand.u32 2147483647, %v1180
        %vm1239 = vcmp.lt.f32.partialorder %v1238, 0.0004427343
        %v1240 = vsel %vm1239, %v1237, %v1234
        %v1241 = vadd.f32 %v1182, 1.0
        %v1242 = vlog2.pop %v1241
        %v1243 = vmul.f32 %v1242, 0.6931472
        %v1244 = vmul.f32 -0.5, %v1182
        %v1245 = vadd.f32 %v1244, 1.0
        %v1246 = vmul.f32 %v1245, %v1182
        %v1247 = vand.u32 2147483647, %v1182
        %vm1248 = vcmp.lt.f32.partialorder %v1247, 0.0004427343
        %v1249 = vsel %vm1248, %v1246, %v1243
        %v1250 = vadd.f32 %v1184, 1.0
        %v1251 = vlog2.pop %v1250
        %v1252 = vmul.f32 %v1251, 0.6931472
        %v1253 = vmul.f32 -0.5, %v1184
        %v1254 = vadd.f32 %v1253, 1.0
        %v1255 = vmul.f32 %v1254, %v1184
        %v1256 = vand.u32 2147483647, %v1184
        %vm1257 = vcmp.lt.f32.partialorder %v1256, 0.0004427343
        %v1258 = vsel %vm1257, %v1255, %v1252
        %v1259 = vadd.f32 %v1186, 1.0
        %v1260 = vlog2.pop %v1259
        %v1261 = vmul.f32 %v1260, 0.6931472
        %v1262 = vmul.f32 -0.5, %v1186
        %v1263 = vadd.f32 %v1262, 1.0
        %v1264 = vmul.f32 %v1263, %v1186
        %v1265 = vand.u32 2147483647, %v1186
        %vm1266 = vcmp.lt.f32.partialorder %v1265, 0.0004427343
        %v1267 = vsel %vm1266, %v1264, %v1261
        %v1268 = vadd.f32 %v1188, 1.0
        %v1269 = vlog2.pop %v1268
        %v1270 = vmul.f32 %v1269, 0.6931472
        %v1271 = vmul.f32 -0.5, %v1188
        %v1272 = vadd.f32 %v1271, 1.0
        %v1273 = vmul.f32 %v1272, %v1188
        %v1274 = vand.u32 2147483647, %v1188
        %vm1275 = vcmp.lt.f32.partialorder %v1274, 0.0004427343
        %v1276 = vsel %vm1275, %v1273, %v1270
        %v1277 = vadd.f32 %v1190, 1.0
        %v1278 = vlog2.pop %v1277
        %v1279 = vmul.f32 %v1278, 0.6931472
        %v1280 = vmul.f32 -0.5, %v1190
        %v1281 = vadd.f32 %v1280, 1.0
        %v1282 = vmul.f32 %v1281, %v1190
        %v1283 = vand.u32 2147483647, %v1190
        %vm1284 = vcmp.lt.f32.partialorder %v1283, 0.0004427343
        %v1285 = vsel %vm1284, %v1282, %v1279
        %v1286 = vadd.f32 %v1192, 1.0
        %v1287 = vlog2.pop %v1286
        %v1288 = vmul.f32 %v1287, 0.6931472
        %v1289 = vmul.f32 -0.5, %v1192
        %v1290 = vadd.f32 %v1289, 1.0
        %v1291 = vmul.f32 %v1290, %v1192
        %v1292 = vand.u32 2147483647, %v1192
        %vm1293 = vcmp.lt.f32.partialorder %v1292, 0.0004427343
        %v1294 = vsel %vm1293, %v1291, %v1288
        %v1295 = vadd.f32 %v1194, 1.0
        %v1296 = vlog2.pop %v1295
        %v1297 = vmul.f32 %v1296, 0.6931472
        %v1298 = vmul.f32 -0.5, %v1194
        %v1299 = vadd.f32 %v1298, 1.0
        %v1300 = vmul.f32 %v1299, %v1194
        %v1301 = vand.u32 2147483647, %v1194
        %vm1302 = vcmp.lt.f32.partialorder %v1301, 0.0004427343
        %v1303 = vsel %vm1302, %v1300, %v1297
        %v1304 = vadd.f32 %v1196, 1.0
        %v1305 = vlog2.pop %v1304
        %v1306 = vmul.f32 %v1305, 0.6931472
        %v1307 = vmul.f32 -0.5, %v1196
        %v1308 = vadd.f32 %v1307, 1.0
        %v1309 = vmul.f32 %v1308, %v1196
        %v1310 = vand.u32 2147483647, %v1196
        %vm1311 = vcmp.lt.f32.partialorder %v1310, 0.0004427343
        %v1312 = vsel %vm1311, %v1309, %v1306
        %v1313 = vadd.f32 %v1198, 1.0
        %v1314 = vlog2.pop %v1313
        %v1315 = vmul.f32 %v1314, 0.6931472
        %v1316 = vmul.f32 -0.5, %v1198
        %v1317 = vadd.f32 %v1316, 1.0
        %v1318 = vmul.f32 %v1317, %v1198
        %v1319 = vand.u32 2147483647, %v1198
        %vm1320 = vcmp.lt.f32.partialorder %v1319, 0.0004427343
        %v1321 = vsel %vm1320, %v1318, %v1315
        %v1322 = vadd.f32 %v1200, 1.0
        %v1323 = vlog2.pop %v1322
        %v1324 = vmul.f32 %v1323, 0.6931472
        %v1325 = vmul.f32 -0.5, %v1200
        %v1326 = vadd.f32 %v1325, 1.0
        %v1327 = vmul.f32 %v1326, %v1200
        %v1328 = vand.u32 2147483647, %v1200
        %vm1329 = vcmp.lt.f32.partialorder %v1328, 0.0004427343
        %v1330 = vsel %vm1329, %v1327, %v1324
        %v1331 = vadd.f32 %v1202, 1.0
        %v1332 = vlog2.pop %v1331
        %v1333 = vmul.f32 %v1332, 0.6931472
        %v1334 = vmul.f32 -0.5, %v1202
        %v1335 = vadd.f32 %v1334, 1.0
        %v1336 = vmul.f32 %v1335, %v1202
        %v1337 = vand.u32 2147483647, %v1202
        %vm1338 = vcmp.lt.f32.partialorder %v1337, 0.0004427343
        %v1339 = vsel %vm1338, %v1336, %v1333
        %v1340 = vadd.f32 %v1204, 1.0
        %v1341 = vlog2.pop %v1340
        %v1342 = vmul.f32 %v1341, 0.6931472
        %v1343 = vmul.f32 -0.5, %v1204
        %v1344 = vadd.f32 %v1343, 1.0
        %v1345 = vmul.f32 %v1344, %v1204
        %v1346 = vand.u32 2147483647, %v1204
        %vm1347 = vcmp.lt.f32.partialorder %v1346, 0.0004427343
        %v1348 = vsel %vm1347, %v1345, %v1342
        %v1349 = vmul.f32 %v1213, %v873
        %v1350 = vmul.f32 %v1222, %v873
        %v1351 = vmul.f32 %v1231, %v873
        %v1352 = vmul.f32 %v1240, %v873
        %v1353 = vmul.f32 %v1249, %v873
        %v1354 = vmul.f32 %v1258, %v873
        %v1355 = vmul.f32 %v1267, %v873
        %v1356 = vmul.f32 %v1276, %v873
        %v1357 = vmul.f32 %v1285, %v873
        %v1358 = vmul.f32 %v1294, %v873
        %v1359 = vmul.f32 %v1303, %v873
        %v1360 = vmul.f32 %v1312, %v873
        %v1361 = vmul.f32 %v1321, %v873
        %v1362 = vmul.f32 %v1330, %v873
        %v1363 = vmul.f32 %v1339, %v873
        %v1364 = vmul.f32 %v1348, %v873
        %v1365 = vsel %vm1157, %v1014, %v1349
        %v1366 = vsel %vm1158, %v1016, %v1350
        %v1367 = vsel %vm1159, %v1103, %v1351
        %v1368 = vsel %vm1160, %v1105, %v1352
        %v1369 = vsel %vm1161, %v1020, %v1353
        %v1370 = vsel %vm1162, %v1022, %v1354
        %v1371 = vsel %vm1163, %v1109, %v1355
        %v1372 = vsel %vm1164, %v1111, %v1356
        %v1373 = vsel %vm1165, %v1026, %v1357
        %v1374 = vsel %vm1166, %v1028, %v1358
        %v1375 = vsel %vm1167, %v1115, %v1359
        %v1376 = vsel %vm1168, %v1117, %v1360
        %v1377 = vsel %vm1169, %v1032, %v1361
        %v1378 = vsel %vm1170, %v1034, %v1362
        %v1379 = vsel %vm1171, %v1121, %v1363
        %v1380 = vsel %vm1172, %v1123, %v1364
        %v1381 = vld [vmem:[%s5] sm:$0xff]
        %v1382 = vld [vmem:[%s5 + $0x8] sm:$0xff]
        %v1383 = vld [vmem:[%s5 + $0x10] sm:$0xff]
        %v1384 = vld [vmem:[%s5 + $0x18] sm:$0xff]
        %v1385 = vld [vmem:[%s6] sm:$0xff]
        %v1386 = vld [vmem:[%s6 + $0x8] sm:$0xff]
        %v1387 = vld [vmem:[%s6 + $0x10] sm:$0xff]
        %v1388 = vld [vmem:[%s6 + $0x18] sm:$0xff]
        %v1390 = vsel %vm449, %v1385, 0
        %v1393 = vsel %vm449, %v1386, 0
        %v1396 = vsel %vm449, %v1387, 0
        %v1399 = vsel %vm449, %v1388, 0
        %1401 = vmatprep.subr.mxu0 0.0
        %1402 = vmatpush1.msra.mxu0 0.0
        %1403 = vmatprep.subr.mxu0 0.0
        %1404 = vmatpush1.msra.mxu0 0.0
        %1405 = vmatprep.subr.mxu0 0.0
        %1406 = vmatpush1.msra.mxu0 0.0
        %1407 = vmatprep.subr.mxu0 0.0
        %1408 = vmatpush1.msra.mxu0 0.0
        %1409 = vmatprep.subr.mxu0 0.0
        %1410 = vmatpush1.msra.mxu0 0.0
        %1411 = vmatprep.subr.mxu0 0.0
        %1412 = vmatpush1.msra.mxu0 0.0
        %1413 = vmatprep.subr.mxu0 0.0
        %1414 = vmatpush1.msra.mxu0 0.0
        %1415 = vmatprep.subr.mxu0 0.0
        %1416 = vmatpush1.msra.mxu0 0.0
        %1417 = vmatprep.subr.mxu0 0.0
        %1418 = vmatpush1.msra.mxu0 0.0
        %1419 = vmatprep.subr.mxu0 0.0
        %1420 = vmatpush1.msra.mxu0 0.0
        %1421 = vmatprep.subr.mxu0 0.0
        %1422 = vmatpush1.msra.mxu0 0.0
        %1423 = vmatprep.subr.mxu0 0.0
        %1424 = vmatpush1.msra.mxu0 0.0
        %1425 = vmatprep.subr.mxu0 0.0
        %1426 = vmatpush1.msra.mxu0 0.0
        %1427 = vmatprep.subr.mxu0 0.0
        %1428 = vmatpush1.msra.mxu0 0.0
        %1429 = vmatprep.subr.mxu0 0.0
        %1430 = vmatpush1.msra.mxu0 0.0
        %1431 = vmatprep.subr.mxu0 %v465
        %1432 = vmatpush1.msra.mxu0 %v463
        %1433 = vmatprep.subr.mxu0 0.0
        %1434 = vmatpush2.msra.mxu0 0.0
        %1435 = vmatprep.subr.mxu0 0.0
        %1436 = vmatpush2.msra.mxu0 0.0
        %1437 = vmatprep.subr.mxu0 0.0
        %1438 = vmatpush2.msra.mxu0 0.0
        %1439 = vmatprep.subr.mxu0 0.0
        %1440 = vmatpush2.msra.mxu0 0.0
        %1441 = vmatprep.subr.mxu0 0.0
        %1442 = vmatpush2.msra.mxu0 0.0
        %1443 = vmatprep.subr.mxu0 0.0
        %1444 = vmatpush2.msra.mxu0 0.0
        %1445 = vmatprep.subr.mxu0 0.0
        %1446 = vmatpush2.msra.mxu0 0.0
        %1447 = vmatprep.subr.mxu0 0.0
        %1448 = vmatpush2.msra.mxu0 0.0
        %1449 = vmatprep.subr.mxu0 0.0
        %1450 = vmatpush2.msra.mxu0 0.0
        %1451 = vmatprep.subr.mxu0 0.0
        %1452 = vmatpush2.msra.mxu0 0.0
        %1453 = vmatprep.subr.mxu0 0.0
        %1454 = vmatpush2.msra.mxu0 0.0
        %1455 = vmatprep.subr.mxu0 0.0
        %1456 = vmatpush2.msra.mxu0 0.0
        %1457 = vmatprep.subr.mxu0 0.0
        %1458 = vmatpush2.msra.mxu0 0.0
        %1459 = vmatprep.subr.mxu0 0.0
        %1460 = vmatpush2.msra.mxu0 0.0
        %1461 = vmatprep.subr.mxu0 0.0
        %1462 = vmatpush2.msra.mxu0 0.0
        %1463 = vmatprep.subr.mxu0 0.0
        %1464 = vmatpush2.msra.mxu0 0.0
        %1465 = vmatprep.mubr.f32.mxu0 0.0
        %1466 = vmatmul.mubr.f32.gmra.mxu0 %v1390
        %v1467 = vpop.f32.mrf.mxu0
        %v1468 = vadd.f32 0.0, %v1467
        %v1469 = vpop.f32.mrf.mxu0
        %v1470 = vadd.f32 0.0, %v1469
        %1471 = vmatprep.mubr.f32.mxu0 0.0
        %1472 = vmatmul.mubr.f32.gmra.mxu0 %v1393
        %v1473 = vpop.f32.mrf.mxu0
        %v1474 = vadd.f32 0.0, %v1473
        %v1475 = vpop.f32.mrf.mxu0
        %v1476 = vadd.f32 0.0, %v1475
        %1477 = vmatprep.mubr.f32.mxu0 0.0
        %1478 = vmatmul.mubr.f32.gmra.mxu0 %v1396
        %v1479 = vpop.f32.mrf.mxu0
        %v1480 = vadd.f32 0.0, %v1479
        %v1481 = vpop.f32.mrf.mxu0
        %v1482 = vadd.f32 0.0, %v1481
        %1483 = vmatprep.mubr.f32.mxu0 0.0
        %1484 = vmatmul.mubr.f32.gmra.mxu0 %v1399
        %v1485 = vpop.f32.mrf.mxu0
        %v1486 = vadd.f32 0.0, %v1485
        %v1487 = vpop.f32.mrf.mxu0
        %v1488 = vadd.f32 0.0, %v1487
        %1489 = vdwg.mxu0
        %1490 = vmatprep.subr.mxu0 0.0
        %1491 = vmatpush1.msra.mxu0 0.0
        %1492 = vmatprep.subr.mxu0 0.0
        %1493 = vmatpush1.msra.mxu0 0.0
        %1494 = vmatprep.subr.mxu0 0.0
        %1495 = vmatpush1.msra.mxu0 0.0
        %1496 = vmatprep.subr.mxu0 0.0
        %1497 = vmatpush1.msra.mxu0 0.0
        %1498 = vmatprep.subr.mxu0 0.0
        %1499 = vmatpush1.msra.mxu0 0.0
        %1500 = vmatprep.subr.mxu0 0.0
        %1501 = vmatpush1.msra.mxu0 0.0
        %1502 = vmatprep.subr.mxu0 0.0
        %1503 = vmatpush1.msra.mxu0 0.0
        %1504 = vmatprep.subr.mxu0 0.0
        %1505 = vmatpush1.msra.mxu0 0.0
        %1506 = vmatprep.subr.mxu0 0.0
        %1507 = vmatpush1.msra.mxu0 0.0
        %1508 = vmatprep.subr.mxu0 0.0
        %1509 = vmatpush1.msra.mxu0 0.0
        %1510 = vmatprep.subr.mxu0 0.0
        %1511 = vmatpush1.msra.mxu0 0.0
        %1512 = vmatprep.subr.mxu0 0.0
        %1513 = vmatpush1.msra.mxu0 0.0
        %1514 = vmatprep.subr.mxu0 0.0
        %1515 = vmatpush1.msra.mxu0 0.0
        %1516 = vmatprep.subr.mxu0 0.0
        %1517 = vmatpush1.msra.mxu0 0.0
        %1518 = vmatprep.subr.mxu0 0.0
        %1519 = vmatpush1.msra.mxu0 0.0
        %1520 = vmatprep.subr.mxu0 %v469
        %1521 = vmatpush1.msra.mxu0 %v467
        %1522 = vmatprep.subr.mxu0 0.0
        %1523 = vmatpush2.msra.mxu0 0.0
        %1524 = vmatprep.subr.mxu0 0.0
        %1525 = vmatpush2.msra.mxu0 0.0
        %1526 = vmatprep.subr.mxu0 0.0
        %1527 = vmatpush2.msra.mxu0 0.0
        %1528 = vmatprep.subr.mxu0 0.0
        %1529 = vmatpush2.msra.mxu0 0.0
        %1530 = vmatprep.subr.mxu0 0.0
        %1531 = vmatpush2.msra.mxu0 0.0
        %1532 = vmatprep.subr.mxu0 0.0
        %1533 = vmatpush2.msra.mxu0 0.0
        %1534 = vmatprep.subr.mxu0 0.0
        %1535 = vmatpush2.msra.mxu0 0.0
        %1536 = vmatprep.subr.mxu0 0.0
        %1537 = vmatpush2.msra.mxu0 0.0
        %1538 = vmatprep.subr.mxu0 0.0
        %1539 = vmatpush2.msra.mxu0 0.0
        %1540 = vmatprep.subr.mxu0 0.0
        %1541 = vmatpush2.msra.mxu0 0.0
        %1542 = vmatprep.subr.mxu0 0.0
        %1543 = vmatpush2.msra.mxu0 0.0
        %1544 = vmatprep.subr.mxu0 0.0
        %1545 = vmatpush2.msra.mxu0 0.0
        %1546 = vmatprep.subr.mxu0 0.0
        %1547 = vmatpush2.msra.mxu0 0.0
        %1548 = vmatprep.subr.mxu0 0.0
        %1549 = vmatpush2.msra.mxu0 0.0
        %1550 = vmatprep.subr.mxu0 0.0
        %1551 = vmatpush2.msra.mxu0 0.0
        %1552 = vmatprep.subr.mxu0 0.0
        %1553 = vmatpush2.msra.mxu0 0.0
        %1554 = vmatprep.mubr.f32.mxu0 0.0
        %1555 = vmatmul.mubr.f32.gmra.mxu0 %v1390
        %v1556 = vpop.f32.mrf.mxu0
        %v1557 = vadd.f32 0.0, %v1556
        %v1558 = vpop.f32.mrf.mxu0
        %v1559 = vadd.f32 0.0, %v1558
        %1560 = vmatprep.mubr.f32.mxu0 0.0
        %1561 = vmatmul.mubr.f32.gmra.mxu0 %v1393
        %v1562 = vpop.f32.mrf.mxu0
        %v1563 = vadd.f32 0.0, %v1562
        %v1564 = vpop.f32.mrf.mxu0
        %v1565 = vadd.f32 0.0, %v1564
        %1566 = vmatprep.mubr.f32.mxu0 0.0
        %1567 = vmatmul.mubr.f32.gmra.mxu0 %v1396
        %v1568 = vpop.f32.mrf.mxu0
        %v1569 = vadd.f32 0.0, %v1568
        %v1570 = vpop.f32.mrf.mxu0
        %v1571 = vadd.f32 0.0, %v1570
        %1572 = vmatprep.mubr.f32.mxu0 0.0
        %1573 = vmatmul.mubr.f32.gmra.mxu0 %v1399
        %v1574 = vpop.f32.mrf.mxu0
        %v1575 = vadd.f32 0.0, %v1574
        %v1576 = vpop.f32.mrf.mxu0
        %v1577 = vadd.f32 0.0, %v1576
        %1578 = vdwg.mxu0
        %vm1579 = vcmask 236544
        %v1581 = vsel %vm1579, %v1381, 0
        %v1584 = vsel %vm1579, %v1382, 0
        %v1587 = vsel %vm1579, %v1383, 0
        %v1590 = vsel %vm1579, %v1384, 0
        %vm1592 = vcmask 1044480
        %v1594 = vsel %vm1592, %v1377, 0
        %v1597 = vsel %vm1592, %v1378, 0
        %v1600 = vsel %vm1592, %v1379, 0
        %v1603 = vsel %vm1592, %v1380, 0
        %1605 = vmatprep.subr.mxu0 0.0
        %1606 = vmatpush1.msra.mxu0 0.0
        %1607 = vmatprep.subr.mxu0 0.0
        %1608 = vmatpush1.msra.mxu0 0.0
        %1609 = vmatprep.subr.mxu0 0.0
        %1610 = vmatpush1.msra.mxu0 0.0
        %1611 = vmatprep.subr.mxu0 0.0
        %1612 = vmatpush1.msra.mxu0 0.0
        %1613 = vmatprep.subr.mxu0 0.0
        %1614 = vmatpush1.msra.mxu0 0.0
        %1615 = vmatprep.subr.mxu0 0.0
        %1616 = vmatpush1.msra.mxu0 0.0
        %1617 = vmatprep.subr.mxu0 0.0
        %1618 = vmatpush1.msra.mxu0 0.0
        %1619 = vmatprep.subr.mxu0 0.0
        %1620 = vmatpush1.msra.mxu0 0.0
        %1621 = vmatprep.subr.mxu0 0.0
        %1622 = vmatpush1.msra.mxu0 0.0
        %1623 = vmatprep.subr.mxu0 0.0
        %1624 = vmatpush1.msra.mxu0 0.0
        %1625 = vmatprep.subr.mxu0 0.0
        %1626 = vmatpush1.msra.mxu0 0.0
        %1627 = vmatprep.subr.mxu0 0.0
        %1628 = vmatpush1.msra.mxu0 0.0
        %1629 = vmatprep.subr.mxu0 %v1597
        %1630 = vmatpush1.msra.mxu0 %v1594
        %1631 = vmatprep.subr.mxu0 %v1374
        %1632 = vmatpush1.msra.mxu0 %v1373
        %1633 = vmatprep.subr.mxu0 %v1370
        %1634 = vmatpush1.msra.mxu0 %v1369
        %1635 = vmatprep.subr.mxu0 %v1366
        %1636 = vmatpush1.msra.mxu0 %v1365
        %1637 = vmatprep.subr.mxu0 0.0
        %1638 = vmatpush2.msra.mxu0 0.0
        %1639 = vmatprep.subr.mxu0 0.0
        %1640 = vmatpush2.msra.mxu0 0.0
        %1641 = vmatprep.subr.mxu0 0.0
        %1642 = vmatpush2.msra.mxu0 0.0
        %1643 = vmatprep.subr.mxu0 0.0
        %1644 = vmatpush2.msra.mxu0 0.0
        %1645 = vmatprep.subr.mxu0 0.0
        %1646 = vmatpush2.msra.mxu0 0.0
        %1647 = vmatprep.subr.mxu0 0.0
        %1648 = vmatpush2.msra.mxu0 0.0
        %1649 = vmatprep.subr.mxu0 0.0
        %1650 = vmatpush2.msra.mxu0 0.0
        %1651 = vmatprep.subr.mxu0 0.0
        %1652 = vmatpush2.msra.mxu0 0.0
        %1653 = vmatprep.subr.mxu0 0.0
        %1654 = vmatpush2.msra.mxu0 0.0
        %1655 = vmatprep.subr.mxu0 0.0
        %1656 = vmatpush2.msra.mxu0 0.0
        %1657 = vmatprep.subr.mxu0 0.0
        %1658 = vmatpush2.msra.mxu0 0.0
        %1659 = vmatprep.subr.mxu0 0.0
        %1660 = vmatpush2.msra.mxu0 0.0
        %1661 = vmatprep.subr.mxu0 0.0
        %1662 = vmatpush2.msra.mxu0 0.0
        %1663 = vmatprep.subr.mxu0 0.0
        %1664 = vmatpush2.msra.mxu0 0.0
        %1665 = vmatprep.subr.mxu0 0.0
        %1666 = vmatpush2.msra.mxu0 0.0
        %1667 = vmatprep.subr.mxu0 0.0
        %1668 = vmatpush2.msra.mxu0 0.0
        %1669 = vmatprep.mubr.f32.mxu0 0.0
        %1670 = vmatmul.mubr.f32.gmra.mxu0 %v1581
        %v1671 = vpop.f32.mrf.mxu0
        %v1672 = vadd.f32 %v1468, %v1671
        %v1673 = vpop.f32.mrf.mxu0
        %v1674 = vadd.f32 %v1470, %v1673
        %1675 = vmatprep.mubr.f32.mxu0 0.0
        %1676 = vmatmul.mubr.f32.gmra.mxu0 %v1584
        %v1677 = vpop.f32.mrf.mxu0
        %v1678 = vadd.f32 %v1474, %v1677
        %v1679 = vpop.f32.mrf.mxu0
        %v1680 = vadd.f32 %v1476, %v1679
        %1681 = vmatprep.mubr.f32.mxu0 0.0
        %1682 = vmatmul.mubr.f32.gmra.mxu0 %v1587
        %v1683 = vpop.f32.mrf.mxu0
        %v1684 = vadd.f32 %v1480, %v1683
        %v1685 = vpop.f32.mrf.mxu0
        %v1686 = vadd.f32 %v1482, %v1685
        %1687 = vmatprep.mubr.f32.mxu0 0.0
        %1688 = vmatmul.mubr.f32.gmra.mxu0 %v1590
        %v1689 = vpop.f32.mrf.mxu0
        %v1690 = vadd.f32 %v1486, %v1689
        %v1691 = vpop.f32.mrf.mxu0
        %v1692 = vadd.f32 %v1488, %v1691
        %1693 = vdwg.mxu0
        %1694 = vmatprep.subr.mxu0 0.0
        %1695 = vmatpush1.msra.mxu0 0.0
        %1696 = vmatprep.subr.mxu0 0.0
        %1697 = vmatpush1.msra.mxu0 0.0
        %1698 = vmatprep.subr.mxu0 0.0
        %1699 = vmatpush1.msra.mxu0 0.0
        %1700 = vmatprep.subr.mxu0 0.0
        %1701 = vmatpush1.msra.mxu0 0.0
        %1702 = vmatprep.subr.mxu0 0.0
        %1703 = vmatpush1.msra.mxu0 0.0
        %1704 = vmatprep.subr.mxu0 0.0
        %1705 = vmatpush1.msra.mxu0 0.0
        %1706 = vmatprep.subr.mxu0 0.0
        %1707 = vmatpush1.msra.mxu0 0.0
        %1708 = vmatprep.subr.mxu0 0.0
        %1709 = vmatpush1.msra.mxu0 0.0
        %1710 = vmatprep.subr.mxu0 0.0
        %1711 = vmatpush1.msra.mxu0 0.0
        %1712 = vmatprep.subr.mxu0 0.0
        %1713 = vmatpush1.msra.mxu0 0.0
        %1714 = vmatprep.subr.mxu0 0.0
        %1715 = vmatpush1.msra.mxu0 0.0
        %1716 = vmatprep.subr.mxu0 0.0
        %1717 = vmatpush1.msra.mxu0 0.0
        %1718 = vmatprep.subr.mxu0 %v1603
        %1719 = vmatpush1.msra.mxu0 %v1600
        %1720 = vmatprep.subr.mxu0 %v1376
        %1721 = vmatpush1.msra.mxu0 %v1375
        %1722 = vmatprep.subr.mxu0 %v1372
        %1723 = vmatpush1.msra.mxu0 %v1371
        %1724 = vmatprep.subr.mxu0 %v1368
        %1725 = vmatpush1.msra.mxu0 %v1367
        %1726 = vmatprep.subr.mxu0 0.0
        %1727 = vmatpush2.msra.mxu0 0.0
        %1728 = vmatprep.subr.mxu0 0.0
        %1729 = vmatpush2.msra.mxu0 0.0
        %1730 = vmatprep.subr.mxu0 0.0
        %1731 = vmatpush2.msra.mxu0 0.0
        %1732 = vmatprep.subr.mxu0 0.0
        %1733 = vmatpush2.msra.mxu0 0.0
        %1734 = vmatprep.subr.mxu0 0.0
        %1735 = vmatpush2.msra.mxu0 0.0
        %1736 = vmatprep.subr.mxu0 0.0
        %1737 = vmatpush2.msra.mxu0 0.0
        %1738 = vmatprep.subr.mxu0 0.0
        %1739 = vmatpush2.msra.mxu0 0.0
        %1740 = vmatprep.subr.mxu0 0.0
        %1741 = vmatpush2.msra.mxu0 0.0
        %1742 = vmatprep.subr.mxu0 0.0
        %1743 = vmatpush2.msra.mxu0 0.0
        %1744 = vmatprep.subr.mxu0 0.0
        %1745 = vmatpush2.msra.mxu0 0.0
        %1746 = vmatprep.subr.mxu0 0.0
        %1747 = vmatpush2.msra.mxu0 0.0
        %1748 = vmatprep.subr.mxu0 0.0
        %1749 = vmatpush2.msra.mxu0 0.0
        %1750 = vmatprep.subr.mxu0 0.0
        %1751 = vmatpush2.msra.mxu0 0.0
        %1752 = vmatprep.subr.mxu0 0.0
        %1753 = vmatpush2.msra.mxu0 0.0
        %1754 = vmatprep.subr.mxu0 0.0
        %1755 = vmatpush2.msra.mxu0 0.0
        %1756 = vmatprep.subr.mxu0 0.0
        %1757 = vmatpush2.msra.mxu0 0.0
        %1758 = vmatprep.mubr.f32.mxu0 0.0
        %1759 = vmatmul.mubr.f32.gmra.mxu0 %v1581
        %v1760 = vpop.f32.mrf.mxu0
        %v1761 = vadd.f32 %v1557, %v1760
        %v1762 = vpop.f32.mrf.mxu0
        %v1763 = vadd.f32 %v1559, %v1762
        %1764 = vmatprep.mubr.f32.mxu0 0.0
        %1765 = vmatmul.mubr.f32.gmra.mxu0 %v1584
        %v1766 = vpop.f32.mrf.mxu0
        %v1767 = vadd.f32 %v1563, %v1766
        %v1768 = vpop.f32.mrf.mxu0
        %v1769 = vadd.f32 %v1565, %v1768
        %1770 = vmatprep.mubr.f32.mxu0 0.0
        %1771 = vmatmul.mubr.f32.gmra.mxu0 %v1587
        %v1772 = vpop.f32.mrf.mxu0
        %v1773 = vadd.f32 %v1569, %v1772
        %v1774 = vpop.f32.mrf.mxu0
        %v1775 = vadd.f32 %v1571, %v1774
        %1776 = vmatprep.mubr.f32.mxu0 0.0
        %1777 = vmatmul.mubr.f32.gmra.mxu0 %v1590
        %v1778 = vpop.f32.mrf.mxu0
        %v1779 = vadd.f32 %v1575, %v1778
        %v1780 = vpop.f32.mrf.mxu0
        %v1781 = vadd.f32 %v1577, %v1780
        %1782 = vdwg.mxu0
        %v1783 = vld [vmem:[%s7] sm:$0xff]
        %v1784 = vld [vmem:[%s7 + $0x8] sm:$0xff]
        %v1785 = vld [vmem:[%s7 + $0x10] sm:$0xff]
        %v1786 = vld [vmem:[%s7 + $0x18] sm:$0xff]
        %1788 = vset.pattern.permute.xlu0 0
        %1789 = vperm.xlu0 %1788, %v1783
        %v1790 = vpop.permute.xlu0 %1789
        %1793 = vset.pattern.permute.xlu0 0
        %1794 = vperm.xlu0 %1793, %v1784
        %v1795 = vpop.permute.xlu0 %1794
        %1798 = vset.pattern.permute.xlu0 0
        %1799 = vperm.xlu0 %1798, %v1785
        %v1800 = vpop.permute.xlu0 %1799
        %1803 = vset.pattern.permute.xlu0 0
        %1804 = vperm.xlu0 %1803, %v1786
        %v1805 = vpop.permute.xlu0 %1804
        %v1807 = vadd.f32 %v1672, %v1790
        %v1808 = vadd.f32 %v1674, %v1790
        %v1809 = vadd.f32 %v1761, %v1790
        %v1810 = vadd.f32 %v1763, %v1790
        %v1811 = vadd.f32 %v1678, %v1795
        %v1812 = vadd.f32 %v1680, %v1795
        %v1813 = vadd.f32 %v1767, %v1795
        %v1814 = vadd.f32 %v1769, %v1795
        %v1815 = vadd.f32 %v1684, %v1800
        %v1816 = vadd.f32 %v1686, %v1800
        %v1817 = vadd.f32 %v1773, %v1800
        %v1818 = vadd.f32 %v1775, %v1800
        %v1819 = vadd.f32 %v1690, %v1805
        %v1820 = vadd.f32 %v1692, %v1805
        %v1821 = vadd.f32 %v1779, %v1805
        %v1822 = vadd.f32 %v1781, %v1805
        %v1823 = vmul.f32 %v1807, 100.0
        %v1824 = vmul.f32 %v1808, 100.0
        %v1825 = vmul.f32 %v1809, 100.0
        %v1826 = vmul.f32 %v1810, 100.0
        %v1827 = vmul.f32 %v1811, 100.0
        %v1828 = vmul.f32 %v1812, 100.0
        %v1829 = vmul.f32 %v1813, 100.0
        %v1830 = vmul.f32 %v1814, 100.0
        %v1831 = vmul.f32 %v1815, 100.0
        %v1832 = vmul.f32 %v1816, 100.0
        %v1833 = vmul.f32 %v1817, 100.0
        %v1834 = vmul.f32 %v1818, 100.0
        %v1835 = vmul.f32 %v1819, 100.0
        %v1836 = vmul.f32 %v1820, 100.0
        %v1837 = vmul.f32 %v1821, 100.0
        %v1838 = vmul.f32 %v1822, 100.0
        %v1839 = vmin.f32 %v1823, 20.0
        %v1840 = vmin.f32 %v1824, 20.0
        %v1841 = vmin.f32 %v1825, 20.0
        %v1842 = vmin.f32 %v1826, 20.0
        %v1843 = vmin.f32 %v1827, 20.0
        %v1844 = vmin.f32 %v1828, 20.0
        %v1845 = vmin.f32 %v1829, 20.0
        %v1846 = vmin.f32 %v1830, 20.0
        %v1847 = vmin.f32 %v1831, 20.0
        %v1848 = vmin.f32 %v1832, 20.0
        %v1849 = vmin.f32 %v1833, 20.0
        %v1850 = vmin.f32 %v1834, 20.0
        %v1851 = vmin.f32 %v1835, 20.0
        %v1852 = vmin.f32 %v1836, 20.0
        %v1853 = vmin.f32 %v1837, 20.0
        %v1854 = vmin.f32 %v1838, 20.0
        %vm1855 = vcmp.gt.f32.partialorder %v1823, 20.0
        %vm1856 = vcmp.gt.f32.partialorder %v1824, 20.0
        %vm1857 = vcmp.gt.f32.partialorder %v1825, 20.0
        %vm1858 = vcmp.gt.f32.partialorder %v1826, 20.0
        %vm1859 = vcmp.gt.f32.partialorder %v1827, 20.0
        %vm1860 = vcmp.gt.f32.partialorder %v1828, 20.0
        %vm1861 = vcmp.gt.f32.partialorder %v1829, 20.0
        %vm1862 = vcmp.gt.f32.partialorder %v1830, 20.0
        %vm1863 = vcmp.gt.f32.partialorder %v1831, 20.0
        %vm1864 = vcmp.gt.f32.partialorder %v1832, 20.0
        %vm1865 = vcmp.gt.f32.partialorder %v1833, 20.0
        %vm1866 = vcmp.gt.f32.partialorder %v1834, 20.0
        %vm1867 = vcmp.gt.f32.partialorder %v1835, 20.0
        %vm1868 = vcmp.gt.f32.partialorder %v1836, 20.0
        %vm1869 = vcmp.gt.f32.partialorder %v1837, 20.0
        %vm1870 = vcmp.gt.f32.partialorder %v1838, 20.0
        %v1871 = vmul.f32 %v1839, 1.442695
        %v1872 = vpow.pop %v1871
        %v1873 = vmul.f32 %v1840, 1.442695
        %v1874 = vpow.pop %v1873
        %v1875 = vmul.f32 %v1841, 1.442695
        %v1876 = vpow.pop %v1875
        %v1877 = vmul.f32 %v1842, 1.442695
        %v1878 = vpow.pop %v1877
        %v1879 = vmul.f32 %v1843, 1.442695
        %v1880 = vpow.pop %v1879
        %v1881 = vmul.f32 %v1844, 1.442695
        %v1882 = vpow.pop %v1881
        %v1883 = vmul.f32 %v1845, 1.442695
        %v1884 = vpow.pop %v1883
        %v1885 = vmul.f32 %v1846, 1.442695
        %v1886 = vpow.pop %v1885
        %v1887 = vmul.f32 %v1847, 1.442695
        %v1888 = vpow.pop %v1887
        %v1889 = vmul.f32 %v1848, 1.442695
        %v1890 = vpow.pop %v1889
        %v1891 = vmul.f32 %v1849, 1.442695
        %v1892 = vpow.pop %v1891
        %v1893 = vmul.f32 %v1850, 1.442695
        %v1894 = vpow.pop %v1893
        %v1895 = vmul.f32 %v1851, 1.442695
        %v1896 = vpow.pop %v1895
        %v1897 = vmul.f32 %v1852, 1.442695
        %v1898 = vpow.pop %v1897
        %v1899 = vmul.f32 %v1853, 1.442695
        %v1900 = vpow.pop %v1899
        %v1901 = vmul.f32 %v1854, 1.442695
        %v1902 = vpow.pop %v1901
        %v1903 = vadd.f32 %v1872, 1.0
        %v1904 = vlog2.pop %v1903
        %v1905 = vmul.f32 %v1904, 0.6931472
        %v1906 = vmul.f32 -0.5, %v1872
        %v1907 = vadd.f32 %v1906, 1.0
        %v1908 = vmul.f32 %v1907, %v1872
        %v1909 = vand.u32 2147483647, %v1872
        %vm1910 = vcmp.lt.f32.partialorder %v1909, 0.0004427343
        %v1911 = vsel %vm1910, %v1908, %v1905
        %v1912 = vadd.f32 %v1874, 1.0
        %v1913 = vlog2.pop %v1912
        %v1914 = vmul.f32 %v1913, 0.6931472
        %v1915 = vmul.f32 -0.5, %v1874
        %v1916 = vadd.f32 %v1915, 1.0
        %v1917 = vmul.f32 %v1916, %v1874
        %v1918 = vand.u32 2147483647, %v1874
        %vm1919 = vcmp.lt.f32.partialorder %v1918, 0.0004427343
        %v1920 = vsel %vm1919, %v1917, %v1914
        %v1921 = vadd.f32 %v1876, 1.0
        %v1922 = vlog2.pop %v1921
        %v1923 = vmul.f32 %v1922, 0.6931472
        %v1924 = vmul.f32 -0.5, %v1876
        %v1925 = vadd.f32 %v1924, 1.0
        %v1926 = vmul.f32 %v1925, %v1876
        %v1927 = vand.u32 2147483647, %v1876
        %vm1928 = vcmp.lt.f32.partialorder %v1927, 0.0004427343
        %v1929 = vsel %vm1928, %v1926, %v1923
        %v1930 = vadd.f32 %v1878, 1.0
        %v1931 = vlog2.pop %v1930
        %v1932 = vmul.f32 %v1931, 0.6931472
        %v1933 = vmul.f32 -0.5, %v1878
        %v1934 = vadd.f32 %v1933, 1.0
        %v1935 = vmul.f32 %v1934, %v1878
        %v1936 = vand.u32 2147483647, %v1878
        %vm1937 = vcmp.lt.f32.partialorder %v1936, 0.0004427343
        %v1938 = vsel %vm1937, %v1935, %v1932
        %v1939 = vadd.f32 %v1880, 1.0
        %v1940 = vlog2.pop %v1939
        %v1941 = vmul.f32 %v1940, 0.6931472
        %v1942 = vmul.f32 -0.5, %v1880
        %v1943 = vadd.f32 %v1942, 1.0
        %v1944 = vmul.f32 %v1943, %v1880
        %v1945 = vand.u32 2147483647, %v1880
        %vm1946 = vcmp.lt.f32.partialorder %v1945, 0.0004427343
        %v1947 = vsel %vm1946, %v1944, %v1941
        %v1948 = vadd.f32 %v1882, 1.0
        %v1949 = vlog2.pop %v1948
        %v1950 = vmul.f32 %v1949, 0.6931472
        %v1951 = vmul.f32 -0.5, %v1882
        %v1952 = vadd.f32 %v1951, 1.0
        %v1953 = vmul.f32 %v1952, %v1882
        %v1954 = vand.u32 2147483647, %v1882
        %vm1955 = vcmp.lt.f32.partialorder %v1954, 0.0004427343
        %v1956 = vsel %vm1955, %v1953, %v1950
        %v1957 = vadd.f32 %v1884, 1.0
        %v1958 = vlog2.pop %v1957
        %v1959 = vmul.f32 %v1958, 0.6931472
        %v1960 = vmul.f32 -0.5, %v1884
        %v1961 = vadd.f32 %v1960, 1.0
        %v1962 = vmul.f32 %v1961, %v1884
        %v1963 = vand.u32 2147483647, %v1884
        %vm1964 = vcmp.lt.f32.partialorder %v1963, 0.0004427343
        %v1965 = vsel %vm1964, %v1962, %v1959
        %v1966 = vadd.f32 %v1886, 1.0
        %v1967 = vlog2.pop %v1966
        %v1968 = vmul.f32 %v1967, 0.6931472
        %v1969 = vmul.f32 -0.5, %v1886
        %v1970 = vadd.f32 %v1969, 1.0
        %v1971 = vmul.f32 %v1970, %v1886
        %v1972 = vand.u32 2147483647, %v1886
        %vm1973 = vcmp.lt.f32.partialorder %v1972, 0.0004427343
        %v1974 = vsel %vm1973, %v1971, %v1968
        %v1975 = vadd.f32 %v1888, 1.0
        %v1976 = vlog2.pop %v1975
        %v1977 = vmul.f32 %v1976, 0.6931472
        %v1978 = vmul.f32 -0.5, %v1888
        %v1979 = vadd.f32 %v1978, 1.0
        %v1980 = vmul.f32 %v1979, %v1888
        %v1981 = vand.u32 2147483647, %v1888
        %vm1982 = vcmp.lt.f32.partialorder %v1981, 0.0004427343
        %v1983 = vsel %vm1982, %v1980, %v1977
        %v1984 = vadd.f32 %v1890, 1.0
        %v1985 = vlog2.pop %v1984
        %v1986 = vmul.f32 %v1985, 0.6931472
        %v1987 = vmul.f32 -0.5, %v1890
        %v1988 = vadd.f32 %v1987, 1.0
        %v1989 = vmul.f32 %v1988, %v1890
        %v1990 = vand.u32 2147483647, %v1890
        %vm1991 = vcmp.lt.f32.partialorder %v1990, 0.0004427343
        %v1992 = vsel %vm1991, %v1989, %v1986
        %v1993 = vadd.f32 %v1892, 1.0
        %v1994 = vlog2.pop %v1993
        %v1995 = vmul.f32 %v1994, 0.6931472
        %v1996 = vmul.f32 -0.5, %v1892
        %v1997 = vadd.f32 %v1996, 1.0
        %v1998 = vmul.f32 %v1997, %v1892
        %v1999 = vand.u32 2147483647, %v1892
        %vm2000 = vcmp.lt.f32.partialorder %v1999, 0.0004427343
        %v2001 = vsel %vm2000, %v1998, %v1995
        %v2002 = vadd.f32 %v1894, 1.0
        %v2003 = vlog2.pop %v2002
        %v2004 = vmul.f32 %v2003, 0.6931472
        %v2005 = vmul.f32 -0.5, %v1894
        %v2006 = vadd.f32 %v2005, 1.0
        %v2007 = vmul.f32 %v2006, %v1894
        %v2008 = vand.u32 2147483647, %v1894
        %vm2009 = vcmp.lt.f32.partialorder %v2008, 0.0004427343
        %v2010 = vsel %vm2009, %v2007, %v2004
        %v2011 = vadd.f32 %v1896, 1.0
        %v2012 = vlog2.pop %v2011
        %v2013 = vmul.f32 %v2012, 0.6931472
        %v2014 = vmul.f32 -0.5, %v1896
        %v2015 = vadd.f32 %v2014, 1.0
        %v2016 = vmul.f32 %v2015, %v1896
        %v2017 = vand.u32 2147483647, %v1896
        %vm2018 = vcmp.lt.f32.partialorder %v2017, 0.0004427343
        %v2019 = vsel %vm2018, %v2016, %v2013
        %v2020 = vadd.f32 %v1898, 1.0
        %v2021 = vlog2.pop %v2020
        %v2022 = vmul.f32 %v2021, 0.6931472
        %v2023 = vmul.f32 -0.5, %v1898
        %v2024 = vadd.f32 %v2023, 1.0
        %v2025 = vmul.f32 %v2024, %v1898
        %v2026 = vand.u32 2147483647, %v1898
        %vm2027 = vcmp.lt.f32.partialorder %v2026, 0.0004427343
        %v2028 = vsel %vm2027, %v2025, %v2022
        %v2029 = vadd.f32 %v1900, 1.0
        %v2030 = vlog2.pop %v2029
        %v2031 = vmul.f32 %v2030, 0.6931472
        %v2032 = vmul.f32 -0.5, %v1900
        %v2033 = vadd.f32 %v2032, 1.0
        %v2034 = vmul.f32 %v2033, %v1900
        %v2035 = vand.u32 2147483647, %v1900
        %vm2036 = vcmp.lt.f32.partialorder %v2035, 0.0004427343
        %v2037 = vsel %vm2036, %v2034, %v2031
        %v2038 = vadd.f32 %v1902, 1.0
        %v2039 = vlog2.pop %v2038
        %v2040 = vmul.f32 %v2039, 0.6931472
        %v2041 = vmul.f32 -0.5, %v1902
        %v2042 = vadd.f32 %v2041, 1.0
        %v2043 = vmul.f32 %v2042, %v1902
        %v2044 = vand.u32 2147483647, %v1902
        %vm2045 = vcmp.lt.f32.partialorder %v2044, 0.0004427343
        %v2046 = vsel %vm2045, %v2043, %v2040
        %v2047 = vmul.f32 %v1911, %v873
        %v2048 = vmul.f32 %v1920, %v873
        %v2049 = vmul.f32 %v1929, %v873
        %v2050 = vmul.f32 %v1938, %v873
        %v2051 = vmul.f32 %v1947, %v873
        %v2052 = vmul.f32 %v1956, %v873
        %v2053 = vmul.f32 %v1965, %v873
        %v2054 = vmul.f32 %v1974, %v873
        %v2055 = vmul.f32 %v1983, %v873
        %v2056 = vmul.f32 %v1992, %v873
        %v2057 = vmul.f32 %v2001, %v873
        %v2058 = vmul.f32 %v2010, %v873
        %v2059 = vmul.f32 %v2019, %v873
        %v2060 = vmul.f32 %v2028, %v873
        %v2061 = vmul.f32 %v2037, %v873
        %v2062 = vmul.f32 %v2046, %v873
        %v2063 = vsel %vm1855, %v1807, %v2047
        %v2064 = vsel %vm1856, %v1808, %v2048
        %v2065 = vsel %vm1857, %v1809, %v2049
        %v2066 = vsel %vm1858, %v1810, %v2050
        %v2067 = vsel %vm1859, %v1811, %v2051
        %v2068 = vsel %vm1860, %v1812, %v2052
        %v2069 = vsel %vm1861, %v1813, %v2053
        %v2070 = vsel %vm1862, %v1814, %v2054
        %v2071 = vsel %vm1863, %v1815, %v2055
        %v2072 = vsel %vm1864, %v1816, %v2056
        %v2073 = vsel %vm1865, %v1817, %v2057
        %v2074 = vsel %vm1866, %v1818, %v2058
        %v2075 = vsel %vm1867, %v1819, %v2059
        %v2076 = vsel %vm1868, %v1820, %v2060
        %v2077 = vsel %vm1869, %v1821, %v2061
        %v2078 = vsel %vm1870, %v1822, %v2062
        %v2079 = vld [vmem:[%s8] sm:$0xff]
        %v2080 = vld [vmem:[%s8 + $0x8] sm:$0xff]
        %v2081 = vld [vmem:[%s8 + $0x10] sm:$0xff]
        %v2082 = vld [vmem:[%s8 + $0x18] sm:$0xff]
        %v2083 = vld [vmem:[%s9] sm:$0xff]
        %v2084 = vld [vmem:[%s9 + $0x8] sm:$0xff]
        %v2085 = vld [vmem:[%s9 + $0x10] sm:$0xff]
        %v2086 = vld [vmem:[%s9 + $0x18] sm:$0xff]
        %2088 = vset.pattern.permute.xlu0 0
        %2089 = vperm.xlu0 %2088, %v2083
        %v2090 = vpop.permute.xlu0 %2089
        %2093 = vset.pattern.permute.xlu0 0
        %2094 = vperm.xlu0 %2093, %v2084
        %v2095 = vpop.permute.xlu0 %2094
        %2098 = vset.pattern.permute.xlu0 0
        %2099 = vperm.xlu0 %2098, %v2085
        %v2100 = vpop.permute.xlu0 %2099
        %2103 = vset.pattern.permute.xlu0 0
        %2104 = vperm.xlu0 %2103, %v2086
        %v2105 = vpop.permute.xlu0 %2104
        %v2108 = vsel %vm934, %v2079, 0
        %v2111 = vsel %vm934, %v2080, 0
        %v2114 = vsel %vm934, %v2081, 0
        %v2117 = vsel %vm934, %v2082, 0
        %2119 = vmatprep.subr.mxu0 0.0
        %2120 = vmatpush1.msra.mxu0 0.0
        %2121 = vmatprep.subr.mxu0 0.0
        %2122 = vmatpush1.msra.mxu0 0.0
        %2123 = vmatprep.subr.mxu0 0.0
        %2124 = vmatpush1.msra.mxu0 0.0
        %2125 = vmatprep.subr.mxu0 0.0
        %2126 = vmatpush1.msra.mxu0 0.0
        %2127 = vmatprep.subr.mxu0 0.0
        %2128 = vmatpush1.msra.mxu0 0.0
        %2129 = vmatprep.subr.mxu0 0.0
        %2130 = vmatpush1.msra.mxu0 0.0
        %2131 = vmatprep.subr.mxu0 0.0
        %2132 = vmatpush1.msra.mxu0 0.0
        %2133 = vmatprep.subr.mxu0 0.0
        %2134 = vmatpush1.msra.mxu0 0.0
        %2135 = vmatprep.subr.mxu0 0.0
        %2136 = vmatpush1.msra.mxu0 0.0
        %2137 = vmatprep.subr.mxu0 0.0
        %2138 = vmatpush1.msra.mxu0 0.0
        %2139 = vmatprep.subr.mxu0 0.0
        %2140 = vmatpush1.msra.mxu0 0.0
        %2141 = vmatprep.subr.mxu0 0.0
        %2142 = vmatpush1.msra.mxu0 0.0
        %2143 = vmatprep.subr.mxu0 %v2076
        %2144 = vmatpush1.msra.mxu0 %v2075
        %2145 = vmatprep.subr.mxu0 %v2072
        %2146 = vmatpush1.msra.mxu0 %v2071
        %2147 = vmatprep.subr.mxu0 %v2068
        %2148 = vmatpush1.msra.mxu0 %v2067
        %2149 = vmatprep.subr.mxu0 %v2064
        %2150 = vmatpush1.msra.mxu0 %v2063
        %2151 = vmatprep.subr.mxu0 0.0
        %2152 = vmatpush2.msra.mxu0 0.0
        %2153 = vmatprep.subr.mxu0 0.0
        %2154 = vmatpush2.msra.mxu0 0.0
        %2155 = vmatprep.subr.mxu0 0.0
        %2156 = vmatpush2.msra.mxu0 0.0
        %2157 = vmatprep.subr.mxu0 0.0
        %2158 = vmatpush2.msra.mxu0 0.0
        %2159 = vmatprep.subr.mxu0 0.0
        %2160 = vmatpush2.msra.mxu0 0.0
        %2161 = vmatprep.subr.mxu0 0.0
        %2162 = vmatpush2.msra.mxu0 0.0
        %2163 = vmatprep.subr.mxu0 0.0
        %2164 = vmatpush2.msra.mxu0 0.0
        %2165 = vmatprep.subr.mxu0 0.0
        %2166 = vmatpush2.msra.mxu0 0.0
        %2167 = vmatprep.subr.mxu0 0.0
        %2168 = vmatpush2.msra.mxu0 0.0
        %2169 = vmatprep.subr.mxu0 0.0
        %2170 = vmatpush2.msra.mxu0 0.0
        %2171 = vmatprep.subr.mxu0 0.0
        %2172 = vmatpush2.msra.mxu0 0.0
        %2173 = vmatprep.subr.mxu0 0.0
        %2174 = vmatpush2.msra.mxu0 0.0
        %2175 = vmatprep.subr.mxu0 0.0
        %2176 = vmatpush2.msra.mxu0 0.0
        %2177 = vmatprep.subr.mxu0 0.0
        %2178 = vmatpush2.msra.mxu0 0.0
        %2179 = vmatprep.subr.mxu0 0.0
        %2180 = vmatpush2.msra.mxu0 0.0
        %2181 = vmatprep.subr.mxu0 0.0
        %2182 = vmatpush2.msra.mxu0 0.0
        %2183 = vmatprep.mubr.f32.mxu0 0.0
        %2184 = vmatmul.mubr.f32.gmra.mxu0 %v2108
        %v2185 = vpop.f32.mrf.mxu0
        %v2186 = vadd.f32 %v2090, %v2185
        %v2187 = vpop.f32.mrf.mxu0
        %v2188 = vadd.f32 %v2090, %v2187
        %2189 = vmatprep.mubr.f32.mxu0 0.0
        %2190 = vmatmul.mubr.f32.gmra.mxu0 %v2111
        %v2191 = vpop.f32.mrf.mxu0
        %v2192 = vadd.f32 %v2095, %v2191
        %v2193 = vpop.f32.mrf.mxu0
        %v2194 = vadd.f32 %v2095, %v2193
        %2195 = vmatprep.mubr.f32.mxu0 0.0
        %2196 = vmatmul.mubr.f32.gmra.mxu0 %v2114
        %v2197 = vpop.f32.mrf.mxu0
        %v2198 = vadd.f32 %v2100, %v2197
        %v2199 = vpop.f32.mrf.mxu0
        %v2200 = vadd.f32 %v2100, %v2199
        %2201 = vmatprep.mubr.f32.mxu0 0.0
        %2202 = vmatmul.mubr.f32.gmra.mxu0 %v2117
        %v2203 = vpop.f32.mrf.mxu0
        %v2204 = vadd.f32 %v2105, %v2203
        %v2205 = vpop.f32.mrf.mxu0
        %v2206 = vadd.f32 %v2105, %v2205
        %2207 = vdwg.mxu0
        %2208 = vmatprep.subr.mxu0 0.0
        %2209 = vmatpush1.msra.mxu0 0.0
        %2210 = vmatprep.subr.mxu0 0.0
        %2211 = vmatpush1.msra.mxu0 0.0
        %2212 = vmatprep.subr.mxu0 0.0
        %2213 = vmatpush1.msra.mxu0 0.0
        %2214 = vmatprep.subr.mxu0 0.0
        %2215 = vmatpush1.msra.mxu0 0.0
        %2216 = vmatprep.subr.mxu0 0.0
        %2217 = vmatpush1.msra.mxu0 0.0
        %2218 = vmatprep.subr.mxu0 0.0
        %2219 = vmatpush1.msra.mxu0 0.0
        %2220 = vmatprep.subr.mxu0 0.0
        %2221 = vmatpush1.msra.mxu0 0.0
        %2222 = vmatprep.subr.mxu0 0.0
        %2223 = vmatpush1.msra.mxu0 0.0
        %2224 = vmatprep.subr.mxu0 0.0
        %2225 = vmatpush1.msra.mxu0 0.0
        %2226 = vmatprep.subr.mxu0 0.0
        %2227 = vmatpush1.msra.mxu0 0.0
        %2228 = vmatprep.subr.mxu0 0.0
        %2229 = vmatpush1.msra.mxu0 0.0
        %2230 = vmatprep.subr.mxu0 0.0
        %2231 = vmatpush1.msra.mxu0 0.0
        %2232 = vmatprep.subr.mxu0 %v2078
        %2233 = vmatpush1.msra.mxu0 %v2077
        %2234 = vmatprep.subr.mxu0 %v2074
        %2235 = vmatpush1.msra.mxu0 %v2073
        %2236 = vmatprep.subr.mxu0 %v2070
        %2237 = vmatpush1.msra.mxu0 %v2069
        %2238 = vmatprep.subr.mxu0 %v2066
        %2239 = vmatpush1.msra.mxu0 %v2065
        %2240 = vmatprep.subr.mxu0 0.0
        %2241 = vmatpush2.msra.mxu0 0.0
        %2242 = vmatprep.subr.mxu0 0.0
        %2243 = vmatpush2.msra.mxu0 0.0
        %2244 = vmatprep.subr.mxu0 0.0
        %2245 = vmatpush2.msra.mxu0 0.0
        %2246 = vmatprep.subr.mxu0 0.0
        %2247 = vmatpush2.msra.mxu0 0.0
        %2248 = vmatprep.subr.mxu0 0.0
        %2249 = vmatpush2.msra.mxu0 0.0
        %2250 = vmatprep.subr.mxu0 0.0
        %2251 = vmatpush2.msra.mxu0 0.0
        %2252 = vmatprep.subr.mxu0 0.0
        %2253 = vmatpush2.msra.mxu0 0.0
        %2254 = vmatprep.subr.mxu0 0.0
        %2255 = vmatpush2.msra.mxu0 0.0
        %2256 = vmatprep.subr.mxu0 0.0
        %2257 = vmatpush2.msra.mxu0 0.0
        %2258 = vmatprep.subr.mxu0 0.0
        %2259 = vmatpush2.msra.mxu0 0.0
        %2260 = vmatprep.subr.mxu0 0.0
        %2261 = vmatpush2.msra.mxu0 0.0
        %2262 = vmatprep.subr.mxu0 0.0
        %2263 = vmatpush2.msra.mxu0 0.0
        %2264 = vmatprep.subr.mxu0 0.0
        %2265 = vmatpush2.msra.mxu0 0.0
        %2266 = vmatprep.subr.mxu0 0.0
        %2267 = vmatpush2.msra.mxu0 0.0
        %2268 = vmatprep.subr.mxu0 0.0
        %2269 = vmatpush2.msra.mxu0 0.0
        %2270 = vmatprep.subr.mxu0 0.0
        %2271 = vmatpush2.msra.mxu0 0.0
        %2272 = vmatprep.mubr.f32.mxu0 0.0
        %2273 = vmatmul.mubr.f32.gmra.mxu0 %v2108
        %v2274 = vpop.f32.mrf.mxu0
        %v2275 = vadd.f32 %v2090, %v2274
        %v2276 = vpop.f32.mrf.mxu0
        %v2277 = vadd.f32 %v2090, %v2276
        %2278 = vmatprep.mubr.f32.mxu0 0.0
        %2279 = vmatmul.mubr.f32.gmra.mxu0 %v2111
        %v2280 = vpop.f32.mrf.mxu0
        %v2281 = vadd.f32 %v2095, %v2280
        %v2282 = vpop.f32.mrf.mxu0
        %v2283 = vadd.f32 %v2095, %v2282
        %2284 = vmatprep.mubr.f32.mxu0 0.0
        %2285 = vmatmul.mubr.f32.gmra.mxu0 %v2114
        %v2286 = vpop.f32.mrf.mxu0
        %v2287 = vadd.f32 %v2100, %v2286
        %v2288 = vpop.f32.mrf.mxu0
        %v2289 = vadd.f32 %v2100, %v2288
        %2290 = vmatprep.mubr.f32.mxu0 0.0
        %2291 = vmatmul.mubr.f32.gmra.mxu0 %v2117
        %v2292 = vpop.f32.mrf.mxu0
        %v2293 = vadd.f32 %v2105, %v2292
        %v2294 = vpop.f32.mrf.mxu0
        %v2295 = vadd.f32 %v2105, %v2294
        %2296 = vdwg.mxu0
        %v2297 = vmul.f32 %v2186, 100.0
        %v2298 = vmul.f32 %v2188, 100.0
        %v2299 = vmul.f32 %v2275, 100.0
        %v2300 = vmul.f32 %v2277, 100.0
        %v2301 = vmul.f32 %v2192, 100.0
        %v2302 = vmul.f32 %v2194, 100.0
        %v2303 = vmul.f32 %v2281, 100.0
        %v2304 = vmul.f32 %v2283, 100.0
        %v2305 = vmul.f32 %v2198, 100.0
        %v2306 = vmul.f32 %v2200, 100.0
        %v2307 = vmul.f32 %v2287, 100.0
        %v2308 = vmul.f32 %v2289, 100.0
        %v2309 = vmul.f32 %v2204, 100.0
        %v2310 = vmul.f32 %v2206, 100.0
        %v2311 = vmul.f32 %v2293, 100.0
        %v2312 = vmul.f32 %v2295, 100.0
        %v2313 = vmin.f32 %v2297, 20.0
        %v2314 = vmin.f32 %v2298, 20.0
        %v2315 = vmin.f32 %v2299, 20.0
        %v2316 = vmin.f32 %v2300, 20.0
        %v2317 = vmin.f32 %v2301, 20.0
        %v2318 = vmin.f32 %v2302, 20.0
        %v2319 = vmin.f32 %v2303, 20.0
        %v2320 = vmin.f32 %v2304, 20.0
        %v2321 = vmin.f32 %v2305, 20.0
        %v2322 = vmin.f32 %v2306, 20.0
        %v2323 = vmin.f32 %v2307, 20.0
        %v2324 = vmin.f32 %v2308, 20.0
        %v2325 = vmin.f32 %v2309, 20.0
        %v2326 = vmin.f32 %v2310, 20.0
        %v2327 = vmin.f32 %v2311, 20.0
        %v2328 = vmin.f32 %v2312, 20.0
        %vm2329 = vcmp.gt.f32.partialorder %v2297, 20.0
        %vm2330 = vcmp.gt.f32.partialorder %v2298, 20.0
        %vm2331 = vcmp.gt.f32.partialorder %v2299, 20.0
        %vm2332 = vcmp.gt.f32.partialorder %v2300, 20.0
        %vm2333 = vcmp.gt.f32.partialorder %v2301, 20.0
        %vm2334 = vcmp.gt.f32.partialorder %v2302, 20.0
        %vm2335 = vcmp.gt.f32.partialorder %v2303, 20.0
        %vm2336 = vcmp.gt.f32.partialorder %v2304, 20.0
        %vm2337 = vcmp.gt.f32.partialorder %v2305, 20.0
        %vm2338 = vcmp.gt.f32.partialorder %v2306, 20.0
        %vm2339 = vcmp.gt.f32.partialorder %v2307, 20.0
        %vm2340 = vcmp.gt.f32.partialorder %v2308, 20.0
        %vm2341 = vcmp.gt.f32.partialorder %v2309, 20.0
        %vm2342 = vcmp.gt.f32.partialorder %v2310, 20.0
        %vm2343 = vcmp.gt.f32.partialorder %v2311, 20.0
        %vm2344 = vcmp.gt.f32.partialorder %v2312, 20.0
        %v2345 = vmul.f32 %v2313, 1.442695
        %v2346 = vpow.pop %v2345
        %v2347 = vmul.f32 %v2314, 1.442695
        %v2348 = vpow.pop %v2347
        %v2349 = vmul.f32 %v2315, 1.442695
        %v2350 = vpow.pop %v2349
        %v2351 = vmul.f32 %v2316, 1.442695
        %v2352 = vpow.pop %v2351
        %v2353 = vmul.f32 %v2317, 1.442695
        %v2354 = vpow.pop %v2353
        %v2355 = vmul.f32 %v2318, 1.442695
        %v2356 = vpow.pop %v2355
        %v2357 = vmul.f32 %v2319, 1.442695
        %v2358 = vpow.pop %v2357
        %v2359 = vmul.f32 %v2320, 1.442695
        %v2360 = vpow.pop %v2359
        %v2361 = vmul.f32 %v2321, 1.442695
        %v2362 = vpow.pop %v2361
        %v2363 = vmul.f32 %v2322, 1.442695
        %v2364 = vpow.pop %v2363
        %v2365 = vmul.f32 %v2323, 1.442695
        %v2366 = vpow.pop %v2365
        %v2367 = vmul.f32 %v2324, 1.442695
        %v2368 = vpow.pop %v2367
        %v2369 = vmul.f32 %v2325, 1.442695
        %v2370 = vpow.pop %v2369
        %v2371 = vmul.f32 %v2326, 1.442695
        %v2372 = vpow.pop %v2371
        %v2373 = vmul.f32 %v2327, 1.442695
        %v2374 = vpow.pop %v2373
        %v2375 = vmul.f32 %v2328, 1.442695
        %v2376 = vpow.pop %v2375
        %v2377 = vadd.f32 %v2346, 1.0
        %v2378 = vlog2.pop %v2377
        %v2379 = vmul.f32 %v2378, 0.6931472
        %v2380 = vmul.f32 -0.5, %v2346
        %v2381 = vadd.f32 %v2380, 1.0
        %v2382 = vmul.f32 %v2381, %v2346
        %v2383 = vand.u32 2147483647, %v2346
        %vm2384 = vcmp.lt.f32.partialorder %v2383, 0.0004427343
        %v2385 = vsel %vm2384, %v2382, %v2379
        %v2386 = vadd.f32 %v2348, 1.0
        %v2387 = vlog2.pop %v2386
        %v2388 = vmul.f32 %v2387, 0.6931472
        %v2389 = vmul.f32 -0.5, %v2348
        %v2390 = vadd.f32 %v2389, 1.0
        %v2391 = vmul.f32 %v2390, %v2348
        %v2392 = vand.u32 2147483647, %v2348
        %vm2393 = vcmp.lt.f32.partialorder %v2392, 0.0004427343
        %v2394 = vsel %vm2393, %v2391, %v2388
        %v2395 = vadd.f32 %v2350, 1.0
        %v2396 = vlog2.pop %v2395
        %v2397 = vmul.f32 %v2396, 0.6931472
        %v2398 = vmul.f32 -0.5, %v2350
        %v2399 = vadd.f32 %v2398, 1.0
        %v2400 = vmul.f32 %v2399, %v2350
        %v2401 = vand.u32 2147483647, %v2350
        %vm2402 = vcmp.lt.f32.partialorder %v2401, 0.0004427343
        %v2403 = vsel %vm2402, %v2400, %v2397
        %v2404 = vadd.f32 %v2352, 1.0
        %v2405 = vlog2.pop %v2404
        %v2406 = vmul.f32 %v2405, 0.6931472
        %v2407 = vmul.f32 -0.5, %v2352
        %v2408 = vadd.f32 %v2407, 1.0
        %v2409 = vmul.f32 %v2408, %v2352
        %v2410 = vand.u32 2147483647, %v2352
        %vm2411 = vcmp.lt.f32.partialorder %v2410, 0.0004427343
        %v2412 = vsel %vm2411, %v2409, %v2406
        %v2413 = vadd.f32 %v2354, 1.0
        %v2414 = vlog2.pop %v2413
        %v2415 = vmul.f32 %v2414, 0.6931472
        %v2416 = vmul.f32 -0.5, %v2354
        %v2417 = vadd.f32 %v2416, 1.0
        %v2418 = vmul.f32 %v2417, %v2354
        %v2419 = vand.u32 2147483647, %v2354
        %vm2420 = vcmp.lt.f32.partialorder %v2419, 0.0004427343
        %v2421 = vsel %vm2420, %v2418, %v2415
        %v2422 = vadd.f32 %v2356, 1.0
        %v2423 = vlog2.pop %v2422
        %v2424 = vmul.f32 %v2423, 0.6931472
        %v2425 = vmul.f32 -0.5, %v2356
        %v2426 = vadd.f32 %v2425, 1.0
        %v2427 = vmul.f32 %v2426, %v2356
        %v2428 = vand.u32 2147483647, %v2356
        %vm2429 = vcmp.lt.f32.partialorder %v2428, 0.0004427343
        %v2430 = vsel %vm2429, %v2427, %v2424
        %v2431 = vadd.f32 %v2358, 1.0
        %v2432 = vlog2.pop %v2431
        %v2433 = vmul.f32 %v2432, 0.6931472
        %v2434 = vmul.f32 -0.5, %v2358
        %v2435 = vadd.f32 %v2434, 1.0
        %v2436 = vmul.f32 %v2435, %v2358
        %v2437 = vand.u32 2147483647, %v2358
        %vm2438 = vcmp.lt.f32.partialorder %v2437, 0.0004427343
        %v2439 = vsel %vm2438, %v2436, %v2433
        %v2440 = vadd.f32 %v2360, 1.0
        %v2441 = vlog2.pop %v2440
        %v2442 = vmul.f32 %v2441, 0.6931472
        %v2443 = vmul.f32 -0.5, %v2360
        %v2444 = vadd.f32 %v2443, 1.0
        %v2445 = vmul.f32 %v2444, %v2360
        %v2446 = vand.u32 2147483647, %v2360
        %vm2447 = vcmp.lt.f32.partialorder %v2446, 0.0004427343
        %v2448 = vsel %vm2447, %v2445, %v2442
        %v2449 = vadd.f32 %v2362, 1.0
        %v2450 = vlog2.pop %v2449
        %v2451 = vmul.f32 %v2450, 0.6931472
        %v2452 = vmul.f32 -0.5, %v2362
        %v2453 = vadd.f32 %v2452, 1.0
        %v2454 = vmul.f32 %v2453, %v2362
        %v2455 = vand.u32 2147483647, %v2362
        %vm2456 = vcmp.lt.f32.partialorder %v2455, 0.0004427343
        %v2457 = vsel %vm2456, %v2454, %v2451
        %v2458 = vadd.f32 %v2364, 1.0
        %v2459 = vlog2.pop %v2458
        %v2460 = vmul.f32 %v2459, 0.6931472
        %v2461 = vmul.f32 -0.5, %v2364
        %v2462 = vadd.f32 %v2461, 1.0
        %v2463 = vmul.f32 %v2462, %v2364
        %v2464 = vand.u32 2147483647, %v2364
        %vm2465 = vcmp.lt.f32.partialorder %v2464, 0.0004427343
        %v2466 = vsel %vm2465, %v2463, %v2460
        %v2467 = vadd.f32 %v2366, 1.0
        %v2468 = vlog2.pop %v2467
        %v2469 = vmul.f32 %v2468, 0.6931472
        %v2470 = vmul.f32 -0.5, %v2366
        %v2471 = vadd.f32 %v2470, 1.0
        %v2472 = vmul.f32 %v2471, %v2366
        %v2473 = vand.u32 2147483647, %v2366
        %vm2474 = vcmp.lt.f32.partialorder %v2473, 0.0004427343
        %v2475 = vsel %vm2474, %v2472, %v2469
        %v2476 = vadd.f32 %v2368, 1.0
        %v2477 = vlog2.pop %v2476
        %v2478 = vmul.f32 %v2477, 0.6931472
        %v2479 = vmul.f32 -0.5, %v2368
        %v2480 = vadd.f32 %v2479, 1.0
        %v2481 = vmul.f32 %v2480, %v2368
        %v2482 = vand.u32 2147483647, %v2368
        %vm2483 = vcmp.lt.f32.partialorder %v2482, 0.0004427343
        %v2484 = vsel %vm2483, %v2481, %v2478
        %v2485 = vadd.f32 %v2370, 1.0
        %v2486 = vlog2.pop %v2485
        %v2487 = vmul.f32 %v2486, 0.6931472
        %v2488 = vmul.f32 -0.5, %v2370
        %v2489 = vadd.f32 %v2488, 1.0
        %v2490 = vmul.f32 %v2489, %v2370
        %v2491 = vand.u32 2147483647, %v2370
        %vm2492 = vcmp.lt.f32.partialorder %v2491, 0.0004427343
        %v2493 = vsel %vm2492, %v2490, %v2487
        %v2494 = vadd.f32 %v2372, 1.0
        %v2495 = vlog2.pop %v2494
        %v2496 = vmul.f32 %v2495, 0.6931472
        %v2497 = vmul.f32 -0.5, %v2372
        %v2498 = vadd.f32 %v2497, 1.0
        %v2499 = vmul.f32 %v2498, %v2372
        %v2500 = vand.u32 2147483647, %v2372
        %vm2501 = vcmp.lt.f32.partialorder %v2500, 0.0004427343
        %v2502 = vsel %vm2501, %v2499, %v2496
        %v2503 = vadd.f32 %v2374, 1.0
        %v2504 = vlog2.pop %v2503
        %v2505 = vmul.f32 %v2504, 0.6931472
        %v2506 = vmul.f32 -0.5, %v2374
        %v2507 = vadd.f32 %v2506, 1.0
        %v2508 = vmul.f32 %v2507, %v2374
        %v2509 = vand.u32 2147483647, %v2374
        %vm2510 = vcmp.lt.f32.partialorder %v2509, 0.0004427343
        %v2511 = vsel %vm2510, %v2508, %v2505
        %v2512 = vadd.f32 %v2376, 1.0
        %v2513 = vlog2.pop %v2512
        %v2514 = vmul.f32 %v2513, 0.6931472
        %v2515 = vmul.f32 -0.5, %v2376
        %v2516 = vadd.f32 %v2515, 1.0
        %v2517 = vmul.f32 %v2516, %v2376
        %v2518 = vand.u32 2147483647, %v2376
        %vm2519 = vcmp.lt.f32.partialorder %v2518, 0.0004427343
        %v2520 = vsel %vm2519, %v2517, %v2514
        %v2521 = vmul.f32 %v2385, %v873
        %v2522 = vmul.f32 %v2394, %v873
        %v2523 = vmul.f32 %v2403, %v873
        %v2524 = vmul.f32 %v2412, %v873
        %v2525 = vmul.f32 %v2421, %v873
        %v2526 = vmul.f32 %v2430, %v873
        %v2527 = vmul.f32 %v2439, %v873
        %v2528 = vmul.f32 %v2448, %v873
        %v2529 = vmul.f32 %v2457, %v873
        %v2530 = vmul.f32 %v2466, %v873
        %v2531 = vmul.f32 %v2475, %v873
        %v2532 = vmul.f32 %v2484, %v873
        %v2533 = vmul.f32 %v2493, %v873
        %v2534 = vmul.f32 %v2502, %v873
        %v2535 = vmul.f32 %v2511, %v873
        %v2536 = vmul.f32 %v2520, %v873
        %v2537 = vsel %vm2329, %v2186, %v2521
        %v2538 = vsel %vm2330, %v2188, %v2522
        %v2539 = vsel %vm2331, %v2275, %v2523
        %v2540 = vsel %vm2332, %v2277, %v2524
        %v2541 = vsel %vm2333, %v2192, %v2525
        %v2542 = vsel %vm2334, %v2194, %v2526
        %v2543 = vsel %vm2335, %v2281, %v2527
        %v2544 = vsel %vm2336, %v2283, %v2528
        %v2545 = vsel %vm2337, %v2198, %v2529
        %v2546 = vsel %vm2338, %v2200, %v2530
        %v2547 = vsel %vm2339, %v2287, %v2531
        %v2548 = vsel %vm2340, %v2289, %v2532
        %v2549 = vsel %vm2341, %v2204, %v2533
        %v2550 = vsel %vm2342, %v2206, %v2534
        %v2551 = vsel %vm2343, %v2293, %v2535
        %v2552 = vsel %vm2344, %v2295, %v2536
        %v2553 = vld [vmem:[%s10] sm:$0xff]
        %v2554 = vld [vmem:[%s10 + $0x8] sm:$0x1]
        %v2555 = vld [vmem:[%s11] sm:$0xff]
        %v2556 = vld [vmem:[%s11 + $0x8] sm:$0x1]
        %2558 = vset.pattern.permute.xlu0 0
        %2559 = vperm.xlu0 %2558, %v2555
        %v2560 = vpop.permute.xlu0 %2559
        %2563 = vset.pattern.permute.xlu0 0
        %2564 = vperm.xlu0 %2563, %v2556
        %v2565 = vpop.permute.xlu0 %2564
        %v2568 = vsel %vm934, %v2553, 0
        %v2571 = vsel %vm934, %v2554, 0
        %2573 = vmatprep.subr.mxu0 0.0
        %2574 = vmatpush1.msra.mxu0 0.0
        %2575 = vmatprep.subr.mxu0 0.0
        %2576 = vmatpush1.msra.mxu0 0.0
        %2577 = vmatprep.subr.mxu0 0.0
        %2578 = vmatpush1.msra.mxu0 0.0
        %2579 = vmatprep.subr.mxu0 0.0
        %2580 = vmatpush1.msra.mxu0 0.0
        %2581 = vmatprep.subr.mxu0 0.0
        %2582 = vmatpush1.msra.mxu0 0.0
        %2583 = vmatprep.subr.mxu0 0.0
        %2584 = vmatpush1.msra.mxu0 0.0
        %2585 = vmatprep.subr.mxu0 0.0
        %2586 = vmatpush1.msra.mxu0 0.0
        %2587 = vmatprep.subr.mxu0 0.0
        %2588 = vmatpush1.msra.mxu0 0.0
        %2589 = vmatprep.subr.mxu0 0.0
        %2590 = vmatpush1.msra.mxu0 0.0
        %2591 = vmatprep.subr.mxu0 0.0
        %2592 = vmatpush1.msra.mxu0 0.0
        %2593 = vmatprep.subr.mxu0 0.0
        %2594 = vmatpush1.msra.mxu0 0.0
        %2595 = vmatprep.subr.mxu0 0.0
        %2596 = vmatpush1.msra.mxu0 0.0
        %2597 = vmatprep.subr.mxu0 %v2550
        %2598 = vmatpush1.msra.mxu0 %v2549
        %2599 = vmatprep.subr.mxu0 %v2546
        %2600 = vmatpush1.msra.mxu0 %v2545
        %2601 = vmatprep.subr.mxu0 %v2542
        %2602 = vmatpush1.msra.mxu0 %v2541
        %2603 = vmatprep.subr.mxu0 %v2538
        %2604 = vmatpush1.msra.mxu0 %v2537
        %2605 = vmatprep.subr.mxu0 0.0
        %2606 = vmatpush2.msra.mxu0 0.0
        %2607 = vmatprep.subr.mxu0 0.0
        %2608 = vmatpush2.msra.mxu0 0.0
        %2609 = vmatprep.subr.mxu0 0.0
        %2610 = vmatpush2.msra.mxu0 0.0
        %2611 = vmatprep.subr.mxu0 0.0
        %2612 = vmatpush2.msra.mxu0 0.0
        %2613 = vmatprep.subr.mxu0 0.0
        %2614 = vmatpush2.msra.mxu0 0.0
        %2615 = vmatprep.subr.mxu0 0.0
        %2616 = vmatpush2.msra.mxu0 0.0
        %2617 = vmatprep.subr.mxu0 0.0
        %2618 = vmatpush2.msra.mxu0 0.0
        %2619 = vmatprep.subr.mxu0 0.0
        %2620 = vmatpush2.msra.mxu0 0.0
        %2621 = vmatprep.subr.mxu0 0.0
        %2622 = vmatpush2.msra.mxu0 0.0
        %2623 = vmatprep.subr.mxu0 0.0
        %2624 = vmatpush2.msra.mxu0 0.0
        %2625 = vmatprep.subr.mxu0 0.0
        %2626 = vmatpush2.msra.mxu0 0.0
        %2627 = vmatprep.subr.mxu0 0.0
        %2628 = vmatpush2.msra.mxu0 0.0
        %2629 = vmatprep.subr.mxu0 0.0
        %2630 = vmatpush2.msra.mxu0 0.0
        %2631 = vmatprep.subr.mxu0 0.0
        %2632 = vmatpush2.msra.mxu0 0.0
        %2633 = vmatprep.subr.mxu0 0.0
        %2634 = vmatpush2.msra.mxu0 0.0
        %2635 = vmatprep.subr.mxu0 0.0
        %2636 = vmatpush2.msra.mxu0 0.0
        %2637 = vmatprep.mubr.f32.mxu0 0.0
        %2638 = vmatmul.mubr.f32.gmra.mxu0 %v2568
        %v2639 = vpop.f32.mrf.mxu0
        %v2640 = vadd.f32 %v2560, %v2639
        %v2641 = vpop.f32.mrf.mxu0
        %v2642 = vadd.f32 %v2560, %v2641
        %2643 = vmatprep.mubr.f32.mxu0 0.0
        %2644 = vmatmul.mubr.f32.gmra.mxu0 %v2571
        %v2645 = vpop.f32.mrf.mxu0
        %v2646 = vadd.f32 %v2565, %v2645
        %v2647 = vpop.f32.mrf.mxu0
        %v2648 = vadd.f32 %v2565, %v2647
        %2649 = vdwg.mxu0
        %2650 = vmatprep.subr.mxu0 0.0
        %2651 = vmatpush1.msra.mxu0 0.0
        %2652 = vmatprep.subr.mxu0 0.0
        %2653 = vmatpush1.msra.mxu0 0.0
        %2654 = vmatprep.subr.mxu0 0.0
        %2655 = vmatpush1.msra.mxu0 0.0
        %2656 = vmatprep.subr.mxu0 0.0
        %2657 = vmatpush1.msra.mxu0 0.0
        %2658 = vmatprep.subr.mxu0 0.0
        %2659 = vmatpush1.msra.mxu0 0.0
        %2660 = vmatprep.subr.mxu0 0.0
        %2661 = vmatpush1.msra.mxu0 0.0
        %2662 = vmatprep.subr.mxu0 0.0
        %2663 = vmatpush1.msra.mxu0 0.0
        %2664 = vmatprep.subr.mxu0 0.0
        %2665 = vmatpush1.msra.mxu0 0.0
        %2666 = vmatprep.subr.mxu0 0.0
        %2667 = vmatpush1.msra.mxu0 0.0
        %2668 = vmatprep.subr.mxu0 0.0
        %2669 = vmatpush1.msra.mxu0 0.0
        %2670 = vmatprep.subr.mxu0 0.0
        %2671 = vmatpush1.msra.mxu0 0.0
        %2672 = vmatprep.subr.mxu0 0.0
        %2673 = vmatpush1.msra.mxu0 0.0
        %2674 = vmatprep.subr.mxu0 %v2552
        %2675 = vmatpush1.msra.mxu0 %v2551
        %2676 = vmatprep.subr.mxu0 %v2548
        %2677 = vmatpush1.msra.mxu0 %v2547
        %2678 = vmatprep.subr.mxu0 %v2544
        %2679 = vmatpush1.msra.mxu0 %v2543
        %2680 = vmatprep.subr.mxu0 %v2540
        %2681 = vmatpush1.msra.mxu0 %v2539
        %2682 = vmatprep.subr.mxu0 0.0
        %2683 = vmatpush2.msra.mxu0 0.0
        %2684 = vmatprep.subr.mxu0 0.0
        %2685 = vmatpush2.msra.mxu0 0.0
        %2686 = vmatprep.subr.mxu0 0.0
        %2687 = vmatpush2.msra.mxu0 0.0
        %2688 = vmatprep.subr.mxu0 0.0
        %2689 = vmatpush2.msra.mxu0 0.0
        %2690 = vmatprep.subr.mxu0 0.0
        %2691 = vmatpush2.msra.mxu0 0.0
        %2692 = vmatprep.subr.mxu0 0.0
        %2693 = vmatpush2.msra.mxu0 0.0
        %2694 = vmatprep.subr.mxu0 0.0
        %2695 = vmatpush2.msra.mxu0 0.0
        %2696 = vmatprep.subr.mxu0 0.0
        %2697 = vmatpush2.msra.mxu0 0.0
        %2698 = vmatprep.subr.mxu0 0.0
        %2699 = vmatpush2.msra.mxu0 0.0
        %2700 = vmatprep.subr.mxu0 0.0
        %2701 = vmatpush2.msra.mxu0 0.0
        %2702 = vmatprep.subr.mxu0 0.0
        %2703 = vmatpush2.msra.mxu0 0.0
        %2704 = vmatprep.subr.mxu0 0.0
        %2705 = vmatpush2.msra.mxu0 0.0
        %2706 = vmatprep.subr.mxu0 0.0
        %2707 = vmatpush2.msra.mxu0 0.0
        %2708 = vmatprep.subr.mxu0 0.0
        %2709 = vmatpush2.msra.mxu0 0.0
        %2710 = vmatprep.subr.mxu0 0.0
        %2711 = vmatpush2.msra.mxu0 0.0
        %2712 = vmatprep.subr.mxu0 0.0
        %2713 = vmatpush2.msra.mxu0 0.0
        %2714 = vmatprep.mubr.f32.mxu0 0.0
        %2715 = vmatmul.mubr.f32.gmra.mxu0 %v2568
        %v2716 = vpop.f32.mrf.mxu0
        %v2717 = vadd.f32 %v2560, %v2716
        %v2718 = vpop.f32.mrf.mxu0
        %v2719 = vadd.f32 %v2560, %v2718
        %2720 = vmatprep.mubr.f32.mxu0 0.0
        %2721 = vmatmul.mubr.f32.gmra.mxu0 %v2571
        %v2722 = vpop.f32.mrf.mxu0
        %v2723 = vadd.f32 %v2565, %v2722
        %v2724 = vpop.f32.mrf.mxu0
        %v2725 = vadd.f32 %v2565, %v2724
        %2726 = vdwg.mxu0
        %2727 = vst [vmem:[%s407] sm:$0xff] %v2640
        %2728 = vst [vmem:[%s407 + $0x8] sm:$0xff] %v2642
        %2729 = vst [vmem:[%s407 + $0x10] sm:$0xff] %v2717
        %2730 = vst [vmem:[%s407 + $0x18] sm:$0xff] %v2719
        %2731 = vst [vmem:[%s407 + $0x20] sm:$0x1] %v2646
        %2732 = vst [vmem:[%s407 + $0x28] sm:$0x1] %v2648
        %2733 = vst [vmem:[%s407 + $0x30] sm:$0x1] %v2723
        %2734 = vst [vmem:[%s407 + $0x38] sm:$0x1] %v2725
        %s2735 = sand.u32 %s291, 1
        %s2736 = scalar_lea.sflag [#allocation3], %s2735
        %s2737 = sand.u32 %s291, 1
        %s2738 = smul.addr %s2737, 64
        %s2739 = scalar_lea.vmem [#allocation2], %s2738
        // Predicated region
        $region69: #{tpu_custom_call.1} parent=67 // pred_check
          %p2740 = pneg %p301
        $region70: #{tpu_custom_call.1} parent=67 // pred_check_branch
          %2742 = sbr.rel (%p2740) target = $region72
        $region71: #{tpu_custom_call.1} parent=67 // pred_region
          %s2743 = smul.u32 4, %s26
          %s2745 = ssub.s32 1024, 1024
          %2746 = vsyncadd %s2736, %s2745
          %s2747 = smul.addr %s2743, 128
          %s2748 = scalar_lea.hbm %s12, %s2747
          %s2749 = sshll.u32 %s2739, 4
          %s2750 = int_to_ptr.vmem [resolvable:$true] %s2749
          %2755 = dma.vmem_to_hbm [thread:$0]  %s2750, 1024, %s2748, %s2736, 512, 1024, 32
        $region72: #{tpu_custom_call.1} parent=67 // pred_fallthru
          _
      $region68: #{tpu_custom_call.1} parent=5 // pred_fallthru
        _
      %p2756 = scmp.le.s32.totalorder 2, %s21
      // Predicated region
      $region73: #{tpu_custom_call.1} parent=5 // pred_check
        %p2757 = pneg %p2756
      $region74: #{tpu_custom_call.1} parent=5 // pred_check_branch
        %2759 = sbr.rel (%p2757) target = $region76
      $region75: #{tpu_custom_call.1} parent=5 // pred_region
        %s2760 = ssub.s32 %s21, 2
        // Predicated region
        $region77: #{tpu_custom_call.1} parent=75 // pred_check
          %p2761 = pneg %p307
        $region78: #{tpu_custom_call.1} parent=75 // pred_check_branch
          %2763 = sbr.rel (%p2761) target = $region80
        $region79: #{tpu_custom_call.1} parent=75 // pred_region
          %s2764 = sand.u32 %s292, 1
          %s2765 = scalar_lea.sflag [#allocation3], %s2764
          %s2766 = sand.u32 %s292, 1
          %s2767 = smul.addr %s2766, 64
          %s2768 = scalar_lea.vmem [#allocation2], %s2767
          %2769 = dma.done %s2765, 1024
        $region80: #{tpu_custom_call.1} parent=75 // pred_fallthru
          _
      $region76: #{tpu_custom_call.1} parent=5 // pred_fallthru
        _
    $region6: #{tpu_custom_call.1} parent=1 // loop_footer
      %s25 = sadd.s32 1, %s21
    $region7: #{tpu_custom_call.1} parent=1 // loop_footer_branch
      %20 = sbr.rel target = $region3
    $region8: #{tpu_custom_call.1} parent=1 // loop_exit
      _
    %2770 = vsyncpa [#allocation3], 1
    %s2771 = scalar_lea.sflag [#allocation3], 1
    %2772 = vsyncpa %s2771, 1

</llo_original>
